<compile_context>
chip_gen: v7x
topology: tpu7x:2x2x1
jax: 0.10.0
libtpu: 0.0.40
codegen_flags: <defaults>
</compile_context>

<pallas_src>
import functools

import jax
import jax.numpy as jnp
from jax.experimental import pallas as pl
from jax.experimental.pallas import tpu as pltpu

EPS = 1e-5  # GlobalLN epsilon


def _round_up(v, m):
    return ((v + m - 1) // m) * m


def _tcn_block_kernel(
    x_ref,      # (1, Cin, Lt)  current time tile of the input
    xh_ref,     # (1, Cin, Hb)  head of the next time tile (right-halo source)
    w1_ref,     # (Cc, Cin)     conv1x1 weight
    b1_ref,     # (Cc, 1)
    a1_ref,     # (1, 1)        PReLU-1 alpha
    g1_ref,     # (Cc, 1)       GlobalLN-1 gamma
    be1_ref,    # (Cc, 1)       GlobalLN-1 beta
    wd_ref,     # (Cc, K)       depthwise conv weight (channel, tap)
    bd_ref,     # (Cc, 1)
    a2_ref,     # (1, 1)        PReLU-2 alpha
    g2_ref,     # (Cc, 1)       GlobalLN-2 gamma
    be2_ref,    # (Cc, 1)       GlobalLN-2 beta
    ws_ref,     # (Cin, Cc)     sconv weight
    bs_ref,     # (Cin, 1)
    o_ref,      # (1, Cin, Lt)  output tile
    stats_ref,  # VMEM (4, Lt)  per-lane partials: [sum1, sumsq1, sum2, sumsq2]
    carry_ref,  # VMEM (Cc, max(pad,1)) left-halo carry of normalized y1
    *,
    kernel_size,
    dilation,
    pad,
    seq_len,
):
    p = pl.program_id(1)          # phase: 0 = LN1 stats, 1 = LN2 stats, 2 = output
    t = pl.program_id(2)          # time-tile index
    num_t = pl.num_programs(2)
    lt = x_ref.shape[2]
    cc = w1_ref.shape[0]
    inv_n = 1.0 / float(cc * seq_len)

    x = x_ref[0]                  # (Cin, Lt)
    w1 = w1_ref[...]              # hoisted: loaded once per grid step
    b1 = b1_ref[...]
    a1 = a1_ref[...]

    def conv1_prelu(xx):
        y = jnp.dot(w1, xx, preferred_element_type=jnp.float32) + b1
        return jnp.where(y > 0, y, a1 * y)

    # ----------------------- phase 0: GlobalLN-1 statistics -------------------
    @pl.when(p == 0)
    def _phase0():
        @pl.when(t == 0)
        def _():
            stats_ref[0:2, :] = jnp.zeros((2, lt), jnp.float32)
            carry_ref[...] = jnp.zeros(carry_ref.shape, jnp.float32)

        y1 = conv1_prelu(x)
        stats_ref[0:1, :] = stats_ref[0:1, :] + jnp.sum(y1, axis=0, keepdims=True)
        stats_ref[1:2, :] = stats_ref[1:2, :] + jnp.sum(y1 * y1, axis=0, keepdims=True)

    # -------------- phases 1 & 2: normalize, dconv, (stats | output) ----------
    @pl.when(p > 0)
    def _phase12():
        # Fold GlobalLN-1 into a single per-channel scale/shift (stats complete).
        s1 = jnp.sum(stats_ref[0:1, :], axis=1, keepdims=True)       # (1, 1)
        q1 = jnp.sum(stats_ref[1:2, :], axis=1, keepdims=True)
        mean1 = s1 * inv_n
        var1 = q1 * inv_n - mean1 * mean1
        scale1 = g1_ref[...] * jax.lax.rsqrt(var1 + EPS)             # (Cc, 1)
        shift1 = be1_ref[...] - mean1 * scale1                       # (Cc, 1)

        y1n = scale1 * conv1_prelu(x) + shift1                       # (Cc, Lt)

        # Assemble the dconv window [left halo | tile | right halo] (no zero-
        # filled full-length scratch; halos come from carry / next-tile head).
        if pad > 0:
            right = scale1 * conv1_prelu(xh_ref[0]) + shift1         # (Cc, Hb)
            right = right[:, :pad] * (t < num_t - 1).astype(jnp.float32)
            left = carry_ref[...] * (t > 0).astype(jnp.float32)      # (Cc, pad)
            window = jnp.concatenate([left, y1n, right], axis=1)     # (Cc, Lt+2p)
            carry_ref[...] = y1n[:, lt - pad:]                       # next tile's halo
        else:
            window = y1n

        # Depthwise dilated conv (per-channel taps) + PReLU-2; taps are static
        # lane slices, per-tap weights hoisted once.
        wd = wd_ref[...]                                             # (Cc, K)
        acc = bd_ref[...] + wd[:, 0:1] * window[:, 0:lt]
        for k in range(1, kernel_size):
            acc = acc + wd[:, k:k + 1] * window[:, k * dilation:k * dilation + lt]
        a2 = a2_ref[...]
        y2 = jnp.where(acc > 0, acc, a2 * acc)                       # (Cc, Lt)

        @pl.when(p == 1)
        def _stats2():
            @pl.when(t == 0)
            def _():
                stats_ref[2:4, :] = jnp.zeros((2, lt), jnp.float32)

            stats_ref[2:3, :] = stats_ref[2:3, :] + jnp.sum(y2, axis=0, keepdims=True)
            stats_ref[3:4, :] = stats_ref[3:4, :] + jnp.sum(y2 * y2, axis=0, keepdims=True)

        @pl.when(p == 2)
        def _finalize():
            s2 = jnp.sum(stats_ref[2:3, :], axis=1, keepdims=True)
            q2 = jnp.sum(stats_ref[3:4, :], axis=1, keepdims=True)
            mean2 = s2 * inv_n
            var2 = q2 * inv_n - mean2 * mean2
            scale2 = g2_ref[...] * jax.lax.rsqrt(var2 + EPS)
            shift2 = be2_ref[...] - mean2 * scale2
            y2n = scale2 * y2 + shift2

            out = (jnp.dot(ws_ref[...], y2n, preferred_element_type=jnp.float32)
                   + bs_ref[...] + x)
            o_ref[0] = out.astype(o_ref.dtype)


def _choose_time_tile(L, pad, l_tile):
    """Pick (Lt, Hb): time tile length and right-halo head-block width."""
    hb0 = _round_up(max(pad, 1), 128)
    if l_tile is not None:
        lt = min(int(l_tile), L)
    else:
        target = 1024
        if L <= max(target, hb0):
            lt = L
        else:
            lt = L
            cand = (target // hb0) * hb0
            while cand >= hb0:
                if L % cand == 0:
                    lt = cand
                    break
                cand -= hb0
    hb = min(hb0, lt)
    if lt != L:
        assert L % lt == 0, "time tile must divide the sequence length"
        assert lt % 128 == 0, "time tile must be a multiple of 128"
        assert lt % hb == 0, "time tile must be a multiple of the halo head block"
    assert pad <= lt and pad <= hb, "dconv halo must fit within one tile / head block"
    return lt, hb


def tcn_block(x, params, *, kernel_size=3, dilation=1, l_tile=None):
    """TCNBlock forward. x: (N, Cin, L) float32 in PyTorch NCL layout -> (N, Cin, L)."""
    N, Cin, L = x.shape
    Cc = params["w1"].shape[0]
    K = int(kernel_size)
    assert K % 2 == 1, "non-causal TCNBlock needs odd kernel_size for same-length output"
    pad = dilation * (K - 1) // 2
    assert pad < L

    Lt, Hb = _choose_time_tile(L, pad, l_tile)
    T = L // Lt
    ltb = max(Lt // Hb, 1)
    last_hb = max(L // Hb - 1, 0)

    x = x.astype(jnp.float32)

    # Kernel-friendly parameter slabs (channels on sublanes; no activation transposes).
    w1 = params["w1"][:, :, 0]                       # (Cc, Cin)
    b1 = params["b1"].reshape(Cc, 1)
    a1 = params["a1"].reshape(1, 1)
    g1 = params["g1"].reshape(Cc, 1)
    be1 = params["be1"].reshape(Cc, 1)
    wd = params["wd"][:, 0, :]                       # (Cc, K)
    bd = params["bd"].reshape(Cc, 1)
    a2 = params["a2"].reshape(1, 1)
    g2 = params["g2"].reshape(Cc, 1)
    be2 = params["be2"].reshape(Cc, 1)
    ws = params["ws"][:, :, 0]                       # (Cin, Cc)
    bs = params["bs"].reshape(Cin, 1)

    def const_spec(shape):
        return pl.BlockSpec(shape, lambda n, p, t: (0,) * len(shape))

    def head_index(n, p, t):
        # Right-halo head of the *next* tile; parked at block 0 during phase 0
        # (unused there) so it is not re-fetched on every stats step.
        idx = jnp.minimum((t + 1) * ltb, last_hb)
        return (n, 0, jnp.where(p == 0, 0, idx))

    def out_index(n, p, t):
        # Output tiles are produced only in phase 2; park on block 0 before that
        # so no write-back happens for tiles the kernel never wrote.
        return (n, 0, jnp.where(p == 2, t, 0))

    kernel = functools.partial(
        _tcn_block_kernel, kernel_size=K, dilation=dilation, pad=pad, seq_len=L,
    )

    # VMEM budget (f32): pipelined blocks + scratch + headroom for temporaries.
    est_bytes = 4 * (
        2 * Cin * Lt + 2 * Cin * Hb + 2 * Cin * Lt
        + 2 * (2 * Cc * Cin + Cc * K + 6 * Cc + 2 * Cin + 2)
        + 4 * Lt + Cc * max(pad, 1)
        + 10 * Cc * (Lt + 2 * pad)
    )
    vmem_limit = int(min(max(2 * est_bytes, 32 * 1024 * 1024), 64 * 1024 * 1024))

    cost = pl.CostEstimate(
        flops=int(N * L * (3 * 2 * Cc * Cin + 2 * Cin * Cc + 4 * K * Cc + 16 * Cc)),
        transcendentals=int(N * 3 * T),
        bytes_accessed=int(4 * (5 * N * Cin * L
                                + 2 * Cc * Cin + Cc * K + 6 * Cc + 2 * Cin + 2)),
    )

    out = pl.pallas_call(
        kernel,
        out_shape=jax.ShapeDtypeStruct((N, Cin, L), jnp.float32),
        grid_spec=pltpu.PrefetchScalarGridSpec(
            num_scalar_prefetch=0,
            grid=(N, 3, T),
            in_specs=[
                pl.BlockSpec((1, Cin, Lt), lambda n, p, t: (n, 0, t)),   # x tile
                pl.BlockSpec((1, Cin, Hb), head_index),                  # next-tile head
                const_spec((Cc, Cin)),   # w1
                const_spec((Cc, 1)),     # b1
                const_spec((1, 1)),      # a1
                const_spec((Cc, 1)),     # g1
                const_spec((Cc, 1)),     # be1
                const_spec((Cc, K)),     # wd
                const_spec((Cc, 1)),     # bd
                const_spec((1, 1)),      # a2
                const_spec((Cc, 1)),     # g2
                const_spec((Cc, 1)),     # be2
                const_spec((Cin, Cc)),   # ws
                const_spec((Cin, 1)),    # bs
            ],
            out_specs=pl.BlockSpec((1, Cin, Lt), out_index),
            scratch_shapes=[
                pltpu.VMEM((4, Lt), jnp.float32),                # LN per-lane partial sums
                pltpu.VMEM((Cc, max(pad, 1)), jnp.float32),      # left-halo carry
            ],
        ),
        compiler_params=pltpu.CompilerParams(
            dimension_semantics=("parallel", "arbitrary", "arbitrary"),
            vmem_limit_bytes=vmem_limit,
        ),
        cost_estimate=cost,
    )(x, x, w1, b1, a1, g1, be1, wd, bd, a2, g2, be2, ws, bs)

    return out


def tcn_block_ref(x, params, *, kernel_size=3, dilation=1):
    """Pure-JAX reference mirroring the PyTorch forward (NCL layout)."""
    pad = dilation * (kernel_size - 1) // 2
    L = x.shape[2]

    y = jnp.einsum("oc,ncl->nol", params["w1"][:, :, 0], x) + params["b1"][None, :, None]
    y = jnp.where(y > 0, y, params["a1"] * y)
    mean = jnp.mean(y, axis=(1, 2), keepdims=True)
    var = jnp.mean((y - mean) ** 2, axis=(1, 2), keepdims=True)
    y = params["g1"][None, :, None] * (y - mean) / jnp.sqrt(var + EPS) + params["be1"][None, :, None]

    yp = jnp.pad(y, ((0, 0), (0, 0), (pad, pad)))
    acc = jnp.zeros_like(y) + params["bd"][None, :, None]
    for k in range(kernel_size):
        acc = acc + yp[:, :, k * dilation:k * dilation + L] * params["wd"][:, 0, k][None, :, None]
    y = acc

    y = jnp.where(y > 0, y, params["a2"] * y)
    mean = jnp.mean(y, axis=(1, 2), keepdims=True)
    var = jnp.mean((y - mean) ** 2, axis=(1, 2), keepdims=True)
    y = params["g2"][None, :, None] * (y - mean) / jnp.sqrt(var + EPS) + params["be2"][None, :, None]

    y = jnp.einsum("oc,ncl->nol", params["ws"][:, :, 0], y) + params["bs"][None, :, None]
    return y + x


def _make_params(key, cin, cc, k):
    ks = jax.random.split(key, 10)
    return {
        "w1": 0.1 * jax.random.normal(ks[0], (cc, cin, 1), jnp.float32),
        "b1": 0.1 * jax.random.normal(ks[1], (cc,), jnp.float32),
        "a1": jnp.array(0.25, jnp.float32),
        "g1": 1.0 + 0.1 * jax.random.normal(ks[2], (cc,), jnp.float32),
        "be1": 0.1 * jax.random.normal(ks[3], (cc,), jnp.float32),
        "wd": 0.1 * jax.random.normal(ks[4], (cc, 1, k), jnp.float32),
        "bd": 0.1 * jax.random.normal(ks[5], (cc,), jnp.float32),
        "a2": jnp.array(0.25, jnp.float32),
        "g2": 1.0 + 0.1 * jax.random.normal(ks[6], (cc,), jnp.float32),
        "be2": 0.1 * jax.random.normal(ks[7], (cc,), jnp.float32),
        "ws": 0.1 * jax.random.normal(ks[8], (cin, cc, 1), jnp.float32),
        "bs": 0.1 * jax.random.normal(ks[9], (cin,), jnp.float32),
    }


if __name__ == "__main__":
    key = jax.random.PRNGKey(0)
    k1, k2, k3, k4 = jax.random.split(key, 4)

    # Config A: multi-tile time axis (T=4), dilation=2 -> exercises halo carry + head.
    N, Cin, Cc, L, K, DIL = 2, 16, 32, 512, 3, 2
    params = _make_params(k1, Cin, Cc, K)
    x = jax.random.normal(k2, (N, Cin, L), jnp.float32)
    out = jax.block_until_ready(tcn_block(x, params, kernel_size=K, dilation=DIL, l_tile=128))
    ref = tcn_block_ref(x, params, kernel_size=K, dilation=DIL)
    assert out.shape == (N, Cin, L)
    err_a = float(jnp.max(jnp.abs(out - ref)))
    assert jnp.allclose(out, ref, atol=1e-3, rtol=1e-3), err_a

    # Config B: single-tile path (auto tiling), dilation=1.
    N, Cin, Cc, L, K, DIL = 1, 8, 16, 256, 3, 1
    params = _make_params(k3, Cin, Cc, K)
    x = jax.random.normal(k4, (N, Cin, L), jnp.float32)
    out = jax.block_until_ready(tcn_block(x, params, kernel_size=K, dilation=DIL))
    ref = tcn_block_ref(x, params, kernel_size=K, dilation=DIL)
    err_b = float(jnp.max(jnp.abs(out - ref)))
    assert jnp.allclose(out, ref, atol=1e-3, rtol=1e-3), err_b

    print("KERNEL_OK")
</pallas_src>

<mosaic_0001>
module attributes {stable_mosaic.version = 11 : i64} {
  func.func @_tcn_block_kernel(%arg0: i32, %arg1: i32, %arg2: i32, %arg3: memref<1x16x128xf32, #tpu.memory_space<vmem>>, %arg4: memref<1x16x128xf32, #tpu.memory_space<vmem>>, %arg5: memref<32x16xf32, #tpu.memory_space<vmem>>, %arg6: memref<32x1xf32, #tpu.memory_space<vmem>>, %arg7: memref<1x1xf32, #tpu.memory_space<vmem>>, %arg8: memref<32x1xf32, #tpu.memory_space<vmem>>, %arg9: memref<32x1xf32, #tpu.memory_space<vmem>>, %arg10: memref<32x3xf32, #tpu.memory_space<vmem>>, %arg11: memref<32x1xf32, #tpu.memory_space<vmem>>, %arg12: memref<1x1xf32, #tpu.memory_space<vmem>>, %arg13: memref<32x1xf32, #tpu.memory_space<vmem>>, %arg14: memref<32x1xf32, #tpu.memory_space<vmem>>, %arg15: memref<16x32xf32, #tpu.memory_space<vmem>>, %arg16: memref<16x1xf32, #tpu.memory_space<vmem>>, %arg17: memref<1x16x128xf32, #tpu.memory_space<vmem>>, %arg18: memref<4x128xf32, #tpu.memory_space<vmem>>, %arg19: memref<32x2xf32, #tpu.memory_space<vmem>>) attributes {dimension_semantics = [#tpu.dimension_semantics<parallel>, #tpu.dimension_semantics<arbitrary>, #tpu.dimension_semantics<arbitrary>], iteration_bounds = array<i64: 2, 3, 4>, scalar_prefetch = 0 : i64, scratch_operands = 2 : i64, tpu.core_type = #tpu.core_type<tc>, window_params = [{transform_indices = @transform_0, window_bounds = array<i64: 1, 16, 128>}, {transform_indices = @transform_1, window_bounds = array<i64: 1, 16, 128>}, {pipeline_mode = #tpu.pipeline_mode<synchronous>, transform_indices = @transform_2, window_bounds = array<i64: 32, 16>}, {pipeline_mode = #tpu.pipeline_mode<synchronous>, transform_indices = @transform_3, window_bounds = array<i64: 32, 1>}, {pipeline_mode = #tpu.pipeline_mode<synchronous>, transform_indices = @transform_4, window_bounds = array<i64: 1, 1>}, {pipeline_mode = #tpu.pipeline_mode<synchronous>, transform_indices = @transform_5, window_bounds = array<i64: 32, 1>}, {pipeline_mode = #tpu.pipeline_mode<synchronous>, transform_indices = @transform_6, window_bounds = array<i64: 32, 1>}, {pipeline_mode = #tpu.pipeline_mode<synchronous>, transform_indices = @transform_7, window_bounds = array<i64: 32, 3>}, {pipeline_mode = #tpu.pipeline_mode<synchronous>, transform_indices = @transform_8, window_bounds = array<i64: 32, 1>}, {pipeline_mode = #tpu.pipeline_mode<synchronous>, transform_indices = @transform_9, window_bounds = array<i64: 1, 1>}, {pipeline_mode = #tpu.pipeline_mode<synchronous>, transform_indices = @transform_10, window_bounds = array<i64: 32, 1>}, {pipeline_mode = #tpu.pipeline_mode<synchronous>, transform_indices = @transform_11, window_bounds = array<i64: 32, 1>}, {pipeline_mode = #tpu.pipeline_mode<synchronous>, transform_indices = @transform_12, window_bounds = array<i64: 16, 32>}, {pipeline_mode = #tpu.pipeline_mode<synchronous>, transform_indices = @transform_13, window_bounds = array<i64: 16, 1>}, {transform_indices = @transform_14, window_bounds = array<i64: 1, 16, 128>}]} {
    %c0 = arith.constant 0 : index
    %c0_0 = arith.constant 0 : index
    %c0_1 = arith.constant 0 : index
    %0 = vector.load %arg3[%c0, %c0_0, %c0_1] : memref<1x16x128xf32, #tpu.memory_space<vmem>>, vector<1x16x128xf32>
    %1 = vector.shape_cast %0 : vector<1x16x128xf32> to vector<16x128xf32>
    %c0_2 = arith.constant 0 : index
    %c0_3 = arith.constant 0 : index
    %2 = vector.load %arg5[%c0_2, %c0_3] : memref<32x16xf32, #tpu.memory_space<vmem>>, vector<32x16xf32>
    %c0_4 = arith.constant 0 : index
    %c0_5 = arith.constant 0 : index
    %3 = vector.load %arg6[%c0_4, %c0_5] : memref<32x1xf32, #tpu.memory_space<vmem>>, vector<32x1xf32>
    %c0_6 = arith.constant 0 : index
    %c0_7 = arith.constant 0 : index
    %4 = vector.load %arg7[%c0_6, %c0_7] : memref<1x1xf32, #tpu.memory_space<vmem>>, vector<1x1xf32>
    %c0_i32 = arith.constant 0 : i32
    %5 = arith.cmpi eq, %arg1, %c0_i32 : i32
    %6 = arith.extui %5 : i1 to i32
    %c0_i32_8 = arith.constant 0 : i32
    %7 = arith.cmpi ne, %6, %c0_i32_8 : i32
    scf.if %7 {
      %c0_i32_11 = arith.constant 0 : i32
      %11 = arith.cmpi eq, %arg2, %c0_i32_11 : i32
      %12 = arith.extui %11 : i1 to i32
      %c0_i32_12 = arith.constant 0 : i32
      %13 = arith.cmpi ne, %12, %c0_i32_12 : i32
      scf.if %13 {
        %cst_23 = arith.constant 0.000000e+00 : f32
        %33 = vector.broadcast %cst_23 : f32 to vector<2x128xf32>
        %c0_24 = arith.constant 0 : index
        %c0_25 = arith.constant 0 : index
        %34 = vector.load %arg18[%c0_24, %c0_25] : memref<4x128xf32, #tpu.memory_space<vmem>>, vector<2x128xf32>
        tpu.vector_store %arg18[%c0_24, %c0_25], %33 {strides = array<i32>} : memref<4x128xf32, #tpu.memory_space<vmem>>, vector<2x128xf32>,
        %cst_26 = arith.constant 0.000000e+00 : f32
        %35 = vector.broadcast %cst_26 : f32 to vector<32x2xf32>
        %c0_27 = arith.constant 0 : index
        %c0_28 = arith.constant 0 : index
        %36 = vector.load %arg19[%c0_27, %c0_28] : memref<32x2xf32, #tpu.memory_space<vmem>>, vector<32x2xf32>
        tpu.vector_store %arg19[%c0_27, %c0_28], %35 {strides = array<i32>} : memref<32x2xf32, #tpu.memory_space<vmem>>, vector<32x2xf32>,
      } else {
      }
      %cst = arith.constant dense<0.000000e+00> : vector<32x128xf32>
      %14 = tpu.matmul %2, %1, %cst {dimension_numbers = #tpu.dot_dimension_numbers<[1], [0], [0], [1], [0, 0, 1, 1], [], []>} : vector<32x16xf32>, vector<16x128xf32>, vector<32x128xf32> -> vector<32x128xf32>
      %15 = vector.broadcast %3 : vector<32x1xf32> to vector<32x128xf32>
      %16 = arith.addf %14, %15 : vector<32x128xf32>
      %cst_13 = arith.constant 0.000000e+00 : f32
      %17 = vector.broadcast %cst_13 : f32 to vector<32x128xf32>
      %18 = arith.cmpf ogt, %16, %17 : vector<32x128xf32>
      %19 = vector.broadcast %4 : vector<1x1xf32> to vector<32x128xf32>
      %20 = arith.mulf %19, %16 : vector<32x128xf32>
      %21 = arith.select %18, %16, %20 : vector<32x128xi1>, vector<32x128xf32>
      %c0_14 = arith.constant 0 : index
      %c0_15 = arith.constant 0 : index
      %22 = vector.load %arg18[%c0_14, %c0_15] : memref<4x128xf32, #tpu.memory_space<vmem>>, vector<1x128xf32>
      %cst_16 = arith.constant dense<0.000000e+00> : vector<128xf32>
      %23 = vector.multi_reduction <add>, %21, %cst_16 [0] : vector<32x128xf32> to vector<128xf32>
      %24 = vector.shape_cast %23 : vector<128xf32> to vector<1x128xf32>
      %25 = arith.addf %22, %24 : vector<1x128xf32>
      %c0_17 = arith.constant 0 : index
      %c0_18 = arith.constant 0 : index
      %26 = vector.load %arg18[%c0_17, %c0_18] : memref<4x128xf32, #tpu.memory_space<vmem>>, vector<1x128xf32>
      tpu.vector_store %arg18[%c0_17, %c0_18], %25 {strides = array<i32>} : memref<4x128xf32, #tpu.memory_space<vmem>>, vector<1x128xf32>,
      %c1 = arith.constant 1 : index
      %c0_19 = arith.constant 0 : index
      %27 = vector.load %arg18[%c1, %c0_19] : memref<4x128xf32, #tpu.memory_space<vmem>>, vector<1x128xf32>
      %28 = arith.mulf %21, %21 : vector<32x128xf32>
      %cst_20 = arith.constant dense<0.000000e+00> : vector<128xf32>
      %29 = vector.multi_reduction <add>, %28, %cst_20 [0] : vector<32x128xf32> to vector<128xf32>
      %30 = vector.shape_cast %29 : vector<128xf32> to vector<1x128xf32>
      %31 = arith.addf %27, %30 : vector<1x128xf32>
      %c1_21 = arith.constant 1 : index
      %c0_22 = arith.constant 0 : index
      %32 = vector.load %arg18[%c1_21, %c0_22] : memref<4x128xf32, #tpu.memory_space<vmem>>, vector<1x128xf32>
      tpu.vector_store %arg18[%c1_21, %c0_22], %31 {strides = array<i32>} : memref<4x128xf32, #tpu.memory_space<vmem>>, vector<1x128xf32>,
    } else {
    }
    %c0_i32_9 = arith.constant 0 : i32
    %8 = arith.cmpi sgt, %arg1, %c0_i32_9 : i32
    %9 = arith.extui %8 : i1 to i32
    %c0_i32_10 = arith.constant 0 : i32
    %10 = arith.cmpi ne, %9, %c0_i32_10 : i32
    scf.if %10 {
      %c0_11 = arith.constant 0 : index
      %c0_12 = arith.constant 0 : index
      %11 = vector.load %arg18[%c0_11, %c0_12] : memref<4x128xf32, #tpu.memory_space<vmem>>, vector<1x128xf32>
      %cst = arith.constant dense<0.000000e+00> : vector<1xf32>
      %12 = vector.multi_reduction <add>, %11, %cst [1] : vector<1x128xf32> to vector<1xf32>
      %13 = vector.shape_cast %12 : vector<1xf32> to vector<1x1xf32>
      %c1 = arith.constant 1 : index
      %c0_13 = arith.constant 0 : index
      %14 = vector.load %arg18[%c1, %c0_13] : memref<4x128xf32, #tpu.memory_space<vmem>>, vector<1x128xf32>
      %cst_14 = arith.constant dense<0.000000e+00> : vector<1xf32>
      %15 = vector.multi_reduction <add>, %14, %cst_14 [1] : vector<1x128xf32> to vector<1xf32>
      %16 = vector.shape_cast %15 : vector<1xf32> to vector<1x1xf32>
      %cst_15 = arith.constant 6.10351563E-5 : f32
      %17 = vector.broadcast %cst_15 : f32 to vector<1x1xf32>
      %18 = arith.mulf %13, %17 : vector<1x1xf32>
      %cst_16 = arith.constant 6.10351563E-5 : f32
      %19 = vector.broadcast %cst_16 : f32 to vector<1x1xf32>
      %20 = arith.mulf %16, %19 : vector<1x1xf32>
      %21 = arith.mulf %18, %18 : vector<1x1xf32>
      %22 = arith.subf %20, %21 : vector<1x1xf32>
      %c0_17 = arith.constant 0 : index
      %c0_18 = arith.constant 0 : index
      %23 = vector.load %arg8[%c0_17, %c0_18] : memref<32x1xf32, #tpu.memory_space<vmem>>, vector<32x1xf32>
      %cst_19 = arith.constant 9.99999974E-6 : f32
      %24 = vector.broadcast %cst_19 : f32 to vector<1x1xf32>
      %25 = arith.addf %22, %24 : vector<1x1xf32>
      %26 = math.rsqrt %25 : vector<1x1xf32>
      %27 = vector.broadcast %26 : vector<1x1xf32> to vector<32x1xf32>
      %28 = arith.mulf %23, %27 : vector<32x1xf32>
      %c0_20 = arith.constant 0 : index
      %c0_21 = arith.constant 0 : index
      %29 = vector.load %arg9[%c0_20, %c0_21] : memref<32x1xf32, #tpu.memory_space<vmem>>, vector<32x1xf32>
      %30 = vector.broadcast %18 : vector<1x1xf32> to vector<32x1xf32>
      %31 = arith.mulf %30, %28 : vector<32x1xf32>
      %32 = arith.subf %29, %31 : vector<32x1xf32>
      %cst_22 = arith.constant dense<0.000000e+00> : vector<32x128xf32>
      %33 = tpu.matmul %2, %1, %cst_22 {dimension_numbers = #tpu.dot_dimension_numbers<[1], [0], [0], [1], [0, 0, 1, 1], [], []>} : vector<32x16xf32>, vector<16x128xf32>, vector<32x128xf32> -> vector<32x128xf32>
      %34 = vector.broadcast %3 : vector<32x1xf32> to vector<32x128xf32>
      %35 = arith.addf %33, %34 : vector<32x128xf32>
      %cst_23 = arith.constant 0.000000e+00 : f32
      %36 = vector.broadcast %cst_23 : f32 to vector<32x128xf32>
      %37 = arith.cmpf ogt, %35, %36 : vector<32x128xf32>
      %38 = vector.broadcast %4 : vector<1x1xf32> to vector<32x128xf32>
      %39 = arith.mulf %38, %35 : vector<32x128xf32>
      %40 = arith.select %37, %35, %39 : vector<32x128xi1>, vector<32x128xf32>
      %41 = vector.broadcast %28 : vector<32x1xf32> to vector<32x128xf32>
      %42 = arith.mulf %41, %40 : vector<32x128xf32>
      %43 = vector.broadcast %32 : vector<32x1xf32> to vector<32x128xf32>
      %44 = arith.addf %42, %43 : vector<32x128xf32>
      %c0_24 = arith.constant 0 : index
      %c0_25 = arith.constant 0 : index
      %c0_26 = arith.constant 0 : index
      %45 = vector.load %arg4[%c0_24, %c0_25, %c0_26] : memref<1x16x128xf32, #tpu.memory_space<vmem>>, vector<1x16x128xf32>
      %46 = vector.shape_cast %45 : vector<1x16x128xf32> to vector<16x128xf32>
      %cst_27 = arith.constant dense<0.000000e+00> : vector<32x128xf32>
      %47 = tpu.matmul %2, %46, %cst_27 {dimension_numbers = #tpu.dot_dimension_numbers<[1], [0], [0], [1], [0, 0, 1, 1], [], []>} : vector<32x16xf32>, vector<16x128xf32>, vector<32x128xf32> -> vector<32x128xf32>
      %48 = vector.broadcast %3 : vector<32x1xf32> to vector<32x128xf32>
      %49 = arith.addf %47, %48 : vector<32x128xf32>
      %cst_28 = arith.constant 0.000000e+00 : f32
      %50 = vector.broadcast %cst_28 : f32 to vector<32x128xf32>
      %51 = arith.cmpf ogt, %49, %50 : vector<32x128xf32>
      %52 = vector.broadcast %4 : vector<1x1xf32> to vector<32x128xf32>
      %53 = arith.mulf %52, %49 : vector<32x128xf32>
      %54 = arith.select %51, %49, %53 : vector<32x128xi1>, vector<32x128xf32>
      %55 = vector.broadcast %28 : vector<32x1xf32> to vector<32x128xf32>
      %56 = arith.mulf %55, %54 : vector<32x128xf32>
      %57 = vector.broadcast %32 : vector<32x1xf32> to vector<32x128xf32>
      %58 = arith.addf %56, %57 : vector<32x128xf32>
      %59 = vector.extract_strided_slice %58 {offsets = [0, 0], sizes = [32, 2], strides = [1, 1]} : vector<32x128xf32> to vector<32x2xf32>
      %c3_i32 = arith.constant 3 : i32
      %60 = arith.cmpi slt, %arg2, %c3_i32 : i32
      %61 = arith.extui %60 : i1 to i32
      %62 = arith.sitofp %61 : i32 to f32
      %63 = vector.broadcast %62 : f32 to vector<32x2xf32>
      %64 = arith.mulf %59, %63 : vector<32x2xf32>
      %c0_29 = arith.constant 0 : index
      %c0_30 = arith.constant 0 : index
      %65 = vector.load %arg19[%c0_29, %c0_30] : memref<32x2xf32, #tpu.memory_space<vmem>>, vector<32x2xf32>
      %c0_i32_31 = arith.constant 0 : i32
      %66 = arith.cmpi sgt, %arg2, %c0_i32_31 : i32
      %67 = arith.extui %66 : i1 to i32
      %68 = arith.sitofp %67 : i32 to f32
      %69 = vector.broadcast %68 : f32 to vector<32x2xf32>
      %70 = arith.mulf %65, %69 : vector<32x2xf32>
      %71 = tpu.concatenate %70, %44, %64 in 1 : vector<32x2xf32>, vector<32x128xf32>, vector<32x2xf32> -> vector<32x132xf32>
      %72 = vector.extract_strided_slice %44 {offsets = [0, 126], sizes = [32, 2], strides = [1, 1]} : vector<32x128xf32> to vector<32x2xf32>
      %c0_32 = arith.constant 0 : index
      %c0_33 = arith.constant 0 : index
      %73 = vector.load %arg19[%c0_32, %c0_33] : memref<32x2xf32, #tpu.memory_space<vmem>>, vector<32x2xf32>
      tpu.vector_store %arg19[%c0_32, %c0_33], %72 {strides = array<i32>} : memref<32x2xf32, #tpu.memory_space<vmem>>, vector<32x2xf32>,
      %c0_34 = arith.constant 0 : index
      %c0_35 = arith.constant 0 : index
      %74 = vector.load %arg10[%c0_34, %c0_35] : memref<32x3xf32, #tpu.memory_space<vmem>>, vector<32x3xf32>
      %c0_36 = arith.constant 0 : index
      %c0_37 = arith.constant 0 : index
      %75 = vector.load %arg11[%c0_36, %c0_37] : memref<32x1xf32, #tpu.memory_space<vmem>>, vector<32x1xf32>
      %76 = vector.extract_strided_slice %74 {offsets = [0, 0], sizes = [32, 1], strides = [1, 1]} : vector<32x3xf32> to vector<32x1xf32>
      %77 = vector.extract_strided_slice %71 {offsets = [0, 0], sizes = [32, 128], strides = [1, 1]} : vector<32x132xf32> to vector<32x128xf32>
      %78 = vector.broadcast %76 : vector<32x1xf32> to vector<32x128xf32>
      %79 = arith.mulf %78, %77 : vector<32x128xf32>
      %80 = vector.broadcast %75 : vector<32x1xf32> to vector<32x128xf32>
      %81 = arith.addf %80, %79 : vector<32x128xf32>
      %82 = vector.extract_strided_slice %74 {offsets = [0, 1], sizes = [32, 1], strides = [1, 1]} : vector<32x3xf32> to vector<32x1xf32>
      %83 = vector.extract_strided_slice %71 {offsets = [0, 2], sizes = [32, 128], strides = [1, 1]} : vector<32x132xf32> to vector<32x128xf32>
      %84 = vector.broadcast %82 : vector<32x1xf32> to vector<32x128xf32>
      %85 = arith.mulf %84, %83 : vector<32x128xf32>
      %86 = arith.addf %81, %85 : vector<32x128xf32>
      %87 = vector.extract_strided_slice %74 {offsets = [0, 2], sizes = [32, 1], strides = [1, 1]} : vector<32x3xf32> to vector<32x1xf32>
      %88 = vector.extract_strided_slice %71 {offsets = [0, 4], sizes = [32, 128], strides = [1, 1]} : vector<32x132xf32> to vector<32x128xf32>
      %89 = vector.broadcast %87 : vector<32x1xf32> to vector<32x128xf32>
      %90 = arith.mulf %89, %88 : vector<32x128xf32>
      %91 = arith.addf %86, %90 : vector<32x128xf32>
      %c0_38 = arith.constant 0 : index
      %c0_39 = arith.constant 0 : index
      %92 = vector.load %arg12[%c0_38, %c0_39] : memref<1x1xf32, #tpu.memory_space<vmem>>, vector<1x1xf32>
      %cst_40 = arith.constant 0.000000e+00 : f32
      %93 = vector.broadcast %cst_40 : f32 to vector<32x128xf32>
      %94 = arith.cmpf ogt, %91, %93 : vector<32x128xf32>
      %95 = vector.broadcast %92 : vector<1x1xf32> to vector<32x128xf32>
      %96 = arith.mulf %95, %91 : vector<32x128xf32>
      %97 = arith.select %94, %91, %96 : vector<32x128xi1>, vector<32x128xf32>
      %c1_i32 = arith.constant 1 : i32
      %98 = arith.cmpi eq, %arg1, %c1_i32 : i32
      %99 = arith.extui %98 : i1 to i32
      %c0_i32_41 = arith.constant 0 : i32
      %100 = arith.cmpi ne, %99, %c0_i32_41 : i32
      scf.if %100 {
        %c0_i32_43 = arith.constant 0 : i32
        %104 = arith.cmpi eq, %arg2, %c0_i32_43 : i32
        %105 = arith.extui %104 : i1 to i32
        %c0_i32_44 = arith.constant 0 : i32
        %106 = arith.cmpi ne, %105, %c0_i32_44 : i32
        scf.if %106 {
          %cst_53 = arith.constant 0.000000e+00 : f32
          %118 = vector.broadcast %cst_53 : f32 to vector<2x128xf32>
          %c2_54 = arith.constant 2 : index
          %c0_55 = arith.constant 0 : index
          %119 = vector.load %arg18[%c2_54, %c0_55] : memref<4x128xf32, #tpu.memory_space<vmem>>, vector<2x128xf32>
          tpu.vector_store %arg18[%c2_54, %c0_55], %118 {strides = array<i32>} : memref<4x128xf32, #tpu.memory_space<vmem>>, vector<2x128xf32>,
        } else {
        }
        %c2 = arith.constant 2 : index
        %c0_45 = arith.constant 0 : index
        %107 = vector.load %arg18[%c2, %c0_45] : memref<4x128xf32, #tpu.memory_space<vmem>>, vector<1x128xf32>
        %cst_46 = arith.constant dense<0.000000e+00> : vector<128xf32>
        %108 = vector.multi_reduction <add>, %97, %cst_46 [0] : vector<32x128xf32> to vector<128xf32>
        %109 = vector.shape_cast %108 : vector<128xf32> to vector<1x128xf32>
        %110 = arith.addf %107, %109 : vector<1x128xf32>
        %c2_47 = arith.constant 2 : index
        %c0_48 = arith.constant 0 : index
        %111 = vector.load %arg18[%c2_47, %c0_48] : memref<4x128xf32, #tpu.memory_space<vmem>>, vector<1x128xf32>
        tpu.vector_store %arg18[%c2_47, %c0_48], %110 {strides = array<i32>} : memref<4x128xf32, #tpu.memory_space<vmem>>, vector<1x128xf32>,
        %c3 = arith.constant 3 : index
        %c0_49 = arith.constant 0 : index
        %112 = vector.load %arg18[%c3, %c0_49] : memref<4x128xf32, #tpu.memory_space<vmem>>, vector<1x128xf32>
        %113 = arith.mulf %97, %97 : vector<32x128xf32>
        %cst_50 = arith.constant dense<0.000000e+00> : vector<128xf32>
        %114 = vector.multi_reduction <add>, %113, %cst_50 [0] : vector<32x128xf32> to vector<128xf32>
        %115 = vector.shape_cast %114 : vector<128xf32> to vector<1x128xf32>
        %116 = arith.addf %112, %115 : vector<1x128xf32>
        %c3_51 = arith.constant 3 : index
        %c0_52 = arith.constant 0 : index
        %117 = vector.load %arg18[%c3_51, %c0_52] : memref<4x128xf32, #tpu.memory_space<vmem>>, vector<1x128xf32>
        tpu.vector_store %arg18[%c3_51, %c0_52], %116 {strides = array<i32>} : memref<4x128xf32, #tpu.memory_space<vmem>>, vector<1x128xf32>,
      } else {
      }
      %c2_i32 = arith.constant 2 : i32
      %101 = arith.cmpi eq, %arg1, %c2_i32 : i32
      %102 = arith.extui %101 : i1 to i32
      %c0_i32_42 = arith.constant 0 : i32
      %103 = arith.cmpi ne, %102, %c0_i32_42 : i32
      scf.if %103 {
        %c2 = arith.constant 2 : index
        %c0_43 = arith.constant 0 : index
        %104 = vector.load %arg18[%c2, %c0_43] : memref<4x128xf32, #tpu.memory_space<vmem>>, vector<1x128xf32>
        %cst_44 = arith.constant dense<0.000000e+00> : vector<1xf32>
        %105 = vector.multi_reduction <add>, %104, %cst_44 [1] : vector<1x128xf32> to vector<1xf32>
        %106 = vector.shape_cast %105 : vector<1xf32> to vector<1x1xf32>
        %c3 = arith.constant 3 : index
        %c0_45 = arith.constant 0 : index
        %107 = vector.load %arg18[%c3, %c0_45] : memref<4x128xf32, #tpu.memory_space<vmem>>, vector<1x128xf32>
        %cst_46 = arith.constant dense<0.000000e+00> : vector<1xf32>
        %108 = vector.multi_reduction <add>, %107, %cst_46 [1] : vector<1x128xf32> to vector<1xf32>
        %109 = vector.shape_cast %108 : vector<1xf32> to vector<1x1xf32>
        %cst_47 = arith.constant 6.10351563E-5 : f32
        %110 = vector.broadcast %cst_47 : f32 to vector<1x1xf32>
        %111 = arith.mulf %106, %110 : vector<1x1xf32>
        %cst_48 = arith.constant 6.10351563E-5 : f32
        %112 = vector.broadcast %cst_48 : f32 to vector<1x1xf32>
        %113 = arith.mulf %109, %112 : vector<1x1xf32>
        %114 = arith.mulf %111, %111 : vector<1x1xf32>
        %115 = arith.subf %113, %114 : vector<1x1xf32>
        %c0_49 = arith.constant 0 : index
        %c0_50 = arith.constant 0 : index
        %116 = vector.load %arg13[%c0_49, %c0_50] : memref<32x1xf32, #tpu.memory_space<vmem>>, vector<32x1xf32>
        %cst_51 = arith.constant 9.99999974E-6 : f32
        %117 = vector.broadcast %cst_51 : f32 to vector<1x1xf32>
        %118 = arith.addf %115, %117 : vector<1x1xf32>
        %119 = math.rsqrt %118 : vector<1x1xf32>
        %120 = vector.broadcast %119 : vector<1x1xf32> to vector<32x1xf32>
        %121 = arith.mulf %116, %120 : vector<32x1xf32>
        %c0_52 = arith.constant 0 : index
        %c0_53 = arith.constant 0 : index
        %122 = vector.load %arg14[%c0_52, %c0_53] : memref<32x1xf32, #tpu.memory_space<vmem>>, vector<32x1xf32>
        %123 = vector.broadcast %111 : vector<1x1xf32> to vector<32x1xf32>
        %124 = arith.mulf %123, %121 : vector<32x1xf32>
        %125 = arith.subf %122, %124 : vector<32x1xf32>
        %126 = vector.broadcast %121 : vector<32x1xf32> to vector<32x128xf32>
        %127 = arith.mulf %126, %97 : vector<32x128xf32>
        %128 = vector.broadcast %125 : vector<32x1xf32> to vector<32x128xf32>
        %129 = arith.addf %127, %128 : vector<32x128xf32>
        %c0_54 = arith.constant 0 : index
        %c0_55 = arith.constant 0 : index
        %130 = vector.load %arg15[%c0_54, %c0_55] : memref<16x32xf32, #tpu.memory_space<vmem>>, vector<16x32xf32>
        %cst_56 = arith.constant dense<0.000000e+00> : vector<16x128xf32>
        %131 = tpu.matmul %130, %129, %cst_56 {dimension_numbers = #tpu.dot_dimension_numbers<[1], [0], [0], [1], [0, 0, 1, 1], [], []>} : vector<16x32xf32>, vector<32x128xf32>, vector<16x128xf32> -> vector<16x128xf32>
        %c0_57 = arith.constant 0 : index
        %c0_58 = arith.constant 0 : index
        %132 = vector.load %arg16[%c0_57, %c0_58] : memref<16x1xf32, #tpu.memory_space<vmem>>, vector<16x1xf32>
        %133 = vector.broadcast %132 : vector<16x1xf32> to vector<16x128xf32>
        %134 = arith.addf %131, %133 : vector<16x128xf32>
        %135 = arith.addf %134, %1 : vector<16x128xf32>
        %c0_59 = arith.constant 0 : index
        %c0_60 = arith.constant 0 : index
        %c0_61 = arith.constant 0 : index
        %136 = vector.load %arg17[%c0_59, %c0_60, %c0_61] : memref<1x16x128xf32, #tpu.memory_space<vmem>>, vector<1x16x128xf32>
        %137 = vector.shape_cast %136 : vector<1x16x128xf32> to vector<16x128xf32>
        %138 = vector.shape_cast %135 : vector<16x128xf32> to vector<1x16x128xf32>
        tpu.vector_store %arg17[%c0_59, %c0_60, %c0_61], %138 {strides = array<i32>} : memref<1x16x128xf32, #tpu.memory_space<vmem>>, vector<1x16x128xf32>,
      } else {
      }
    } else {
    }
    return
  }
  func.func @transform_0(%arg0: i32, %arg1: i32, %arg2: i32) -> (i32, i32, i32) {
    %c0_i32 = arith.constant 0 : i32
    %c0_i32_0 = arith.constant 0 : i32
    return %arg0, %c0_i32, %arg2 : i32, i32, i32
  }
  func.func @transform_1(%arg0: i32, %arg1: i32, %arg2: i32) -> (i32, i32, i32) {
    %c1_i32 = arith.constant 1 : i32
    %0 = arith.addi %arg2, %c1_i32 : i32
    %c1_i32_0 = arith.constant 1 : i32
    %1 = arith.muli %0, %c1_i32_0 : i32
    %c3_i32 = arith.constant 3 : i32
    %2 = arith.minsi %1, %c3_i32 : i32
    %c0_i32 = arith.constant 0 : i32
    %3 = arith.cmpi eq, %arg1, %c0_i32 : i32
    %c0_i32_1 = arith.constant 0 : i32
    %4 = arith.select %3, %c0_i32_1, %2 : i32
    %c0_i32_2 = arith.constant 0 : i32
    %c0_i32_3 = arith.constant 0 : i32
    return %arg0, %c0_i32_2, %4 : i32, i32, i32
  }
  func.func @transform_2(%arg0: i32, %arg1: i32, %arg2: i32) -> (i32, i32) {
    %c0_i32 = arith.constant 0 : i32
    %c0_i32_0 = arith.constant 0 : i32
    %c0_i32_1 = arith.constant 0 : i32
    return %c0_i32, %c0_i32_0 : i32, i32
  }
  func.func @transform_3(%arg0: i32, %arg1: i32, %arg2: i32) -> (i32, i32) {
    %c0_i32 = arith.constant 0 : i32
    %c0_i32_0 = arith.constant 0 : i32
    %c0_i32_1 = arith.constant 0 : i32
    return %c0_i32, %c0_i32_0 : i32, i32
  }
  func.func @transform_4(%arg0: i32, %arg1: i32, %arg2: i32) -> (i32, i32) {
    %c0_i32 = arith.constant 0 : i32
    %c0_i32_0 = arith.constant 0 : i32
    %c0_i32_1 = arith.constant 0 : i32
    return %c0_i32, %c0_i32_0 : i32, i32
  }
  func.func @transform_5(%arg0: i32, %arg1: i32, %arg2: i32) -> (i32, i32) {
    %c0_i32 = arith.constant 0 : i32
    %c0_i32_0 = arith.constant 0 : i32
    %c0_i32_1 = arith.constant 0 : i32
    return %c0_i32, %c0_i32_0 : i32, i32
  }
  func.func @transform_6(%arg0: i32, %arg1: i32, %arg2: i32) -> (i32, i32) {
    %c0_i32 = arith.constant 0 : i32
    %c0_i32_0 = arith.constant 0 : i32
    %c0_i32_1 = arith.constant 0 : i32
    return %c0_i32, %c0_i32_0 : i32, i32
  }
  func.func @transform_7(%arg0: i32, %arg1: i32, %arg2: i32) -> (i32, i32) {
    %c0_i32 = arith.constant 0 : i32
    %c0_i32_0 = arith.constant 0 : i32
    %c0_i32_1 = arith.constant 0 : i32
    return %c0_i32, %c0_i32_0 : i32, i32
  }
  func.func @transform_8(%arg0: i32, %arg1: i32, %arg2: i32) -> (i32, i32) {
    %c0_i32 = arith.constant 0 : i32
    %c0_i32_0 = arith.constant 0 : i32
    %c0_i32_1 = arith.constant 0 : i32
    return %c0_i32, %c0_i32_0 : i32, i32
  }
  func.func @transform_9(%arg0: i32, %arg1: i32, %arg2: i32) -> (i32, i32) {
    %c0_i32 = arith.constant 0 : i32
    %c0_i32_0 = arith.constant 0 : i32
    %c0_i32_1 = arith.constant 0 : i32
    return %c0_i32, %c0_i32_0 : i32, i32
  }
  func.func @transform_10(%arg0: i32, %arg1: i32, %arg2: i32) -> (i32, i32) {
    %c0_i32 = arith.constant 0 : i32
    %c0_i32_0 = arith.constant 0 : i32
    %c0_i32_1 = arith.constant 0 : i32
    return %c0_i32, %c0_i32_0 : i32, i32
  }
  func.func @transform_11(%arg0: i32, %arg1: i32, %arg2: i32) -> (i32, i32) {
    %c0_i32 = arith.constant 0 : i32
    %c0_i32_0 = arith.constant 0 : i32
    %c0_i32_1 = arith.constant 0 : i32
    return %c0_i32, %c0_i32_0 : i32, i32
  }
  func.func @transform_12(%arg0: i32, %arg1: i32, %arg2: i32) -> (i32, i32) {
    %c0_i32 = arith.constant 0 : i32
    %c0_i32_0 = arith.constant 0 : i32
    %c0_i32_1 = arith.constant 0 : i32
    return %c0_i32, %c0_i32_0 : i32, i32
  }
  func.func @transform_13(%arg0: i32, %arg1: i32, %arg2: i32) -> (i32, i32) {
    %c0_i32 = arith.constant 0 : i32
    %c0_i32_0 = arith.constant 0 : i32
    %c0_i32_1 = arith.constant 0 : i32
    return %c0_i32, %c0_i32_0 : i32, i32
  }
  func.func @transform_14(%arg0: i32, %arg1: i32, %arg2: i32) -> (i32, i32, i32) {
    %c2_i32 = arith.constant 2 : i32
    %0 = arith.cmpi eq, %arg1, %c2_i32 : i32
    %c0_i32 = arith.constant 0 : i32
    %1 = arith.select %0, %arg2, %c0_i32 : i32
    %c0_i32_0 = arith.constant 0 : i32
    %c0_i32_1 = arith.constant 0 : i32
    return %arg0, %c0_i32_0, %1 : i32, i32, i32
  }
}

</mosaic_0001>

<llo_original>
// kernel: tpu_custom_call.1
$region0: #{tpu_custom_call.1}
  #allocation0 [shape = 'u32[]', space=smem, size = 0x4, offset = 0x4, fixed_abs, tag = 'smem constant byte address 0x4 - core index']
  #allocation1 [shape = 'u32[144,128]{1,0:T(1,128)}', space=vmem, size = 0x12000, scoped, tag = 'internal scratch']
  #allocation2 [shape = 'f32[4,128]{1,0:T(4,128)}', space=vmem, size = 0x800, scoped, tag = 'scratch operand']
  #allocation3 [shape = 'f32[32,2]{1,0:T(8,128)}', space=vmem, size = 0x4000, scoped, tag = 'scratch operand']
  #allocation4 [shape = 'f32[1,1]{1,0:T(1,128)S(1)}', space=vmem, size = 0x200, scoped, tag = 'scoped memory for tpu_custom_call.1']
  #allocation5 [shape = 'f32[1,1]{1,0:T(1,128)S(1)}', space=vmem, size = 0x200, scoped, tag = 'scoped memory for tpu_custom_call.1']
  %s0 = inlined_call_operand.vmem [shape: f32[2,16,512], index: 0, kind: input, shape index: {}]
  %s1 = inlined_call_operand.vmem [shape: f32[2,16,512], index: 1, kind: input, shape index: {}]
  %s2 = inlined_call_operand.vmem [shape: f32[32,16], index: 2, kind: input, shape index: {}]
  %s3 = inlined_call_operand.vmem [shape: f32[32,1], index: 3, kind: input, shape index: {}]
  %s4 = inlined_call_operand.<no memory space> [shape: f32[1,1], index: 4, kind: input, shape index: {}]
  %s5 = inlined_call_operand.vmem [shape: f32[32,1], index: 5, kind: input, shape index: {}]
  %s6 = inlined_call_operand.vmem [shape: f32[32,1], index: 6, kind: input, shape index: {}]
  %s7 = inlined_call_operand.vmem [shape: f32[32,3], index: 7, kind: input, shape index: {}]
  %s8 = inlined_call_operand.vmem [shape: f32[32,1], index: 8, kind: input, shape index: {}]
  %s9 = inlined_call_operand.<no memory space> [shape: f32[1,1], index: 9, kind: input, shape index: {}]
  %s10 = inlined_call_operand.vmem [shape: f32[32,1], index: 10, kind: input, shape index: {}]
  %s11 = inlined_call_operand.vmem [shape: f32[32,1], index: 11, kind: input, shape index: {}]
  %s12 = inlined_call_operand.vmem [shape: f32[16,32], index: 12, kind: input, shape index: {}]
  %s13 = inlined_call_operand.vmem [shape: f32[16,1], index: 13, kind: input, shape index: {}]
  %s14 = inlined_call_operand.hbm [shape: f32[2,16,512], index: 14, kind: output, shape index: {}]
  %s15 = sld [smem:[#allocation0]]
  $region189: #{tpu_custom_call.1} parent=0
    _
  %s17 = ssub.s32 1, %s15
  %s18 = scalar_select 0, %s17, %s15
  %v19 = vstv %s4
  %20 = vst [vmem:[#allocation4] sm:$0x1] %v19
  %v21 = vstv %s9
  %22 = vst [vmem:[#allocation5] sm:$0x1] %v21
  $region1: #{tpu_custom_call.1} parent=0
    #allocation6 [shape = 'u8[16384]{0}', space=vmem, size = 0x4000, scoped, tag = 'input window, operand 0']
    #allocation7 [shape = 'u8[16384]{0}', space=vmem, size = 0x4000, scoped, tag = 'input window, operand 1']
    #allocation8 [shape = 'u8[16384]{0}', space=vmem, size = 0x4000, scoped, tag = 'output window, operand 0']
    #allocation9 [shape = 's32[2]{0}', space=sflag, size = 0x8, scoped, tag = 'scoped memory for tpu_custom_call.1']
    %23 = vsyncpa [#allocation9], 0
    %s24 = scalar_lea.sflag [#allocation9], 1
    %25 = vsyncpa %s24, 0
    loop: start=0, step=1, limit=26
    $region2: #{tpu_custom_call.1} parent=1 // loop_pre_header
      _
    $region3: #{tpu_custom_call.1} parent=1 // loop_header
      %s27 = sphi 0, %s31
      %p28 = scmp.ge.s32.totalorder %s27, 26
      %s34 = sphi 0, %s53
      %s35 = sphi 0, %s49
      %s36 = sphi 0, %s45
      %s37 = sphi 0, %s34
      %s38 = sphi 0, %s35
      %s39 = sphi 0, %s36
      %s40 = sphi 0, %s37
      %s41 = sphi 0, %s38
      %s42 = sphi 0, %s39
      %s58 = sphi 0, %s60
      %s61 = sphi 0, %s58
      %s62 = sphi 0, %s61
      %s78 = sphi 0, %s62
      %s96 = sphi 0, %s98
      %s99 = sphi 0, %s96
      %s100 = sphi 0, %s99
      %s116 = sphi 0, %s100
      %s120 = sphi 0, %s120
      %s122 = sphi 0, %s120
      %s123 = sphi 0, %s122
      %s137 = sphi 0, %s123
      %s141 = sphi 0, %s141
      %s143 = sphi 0, %s141
      %s144 = sphi 0, %s143
      %s158 = sphi 0, %s144
      %s162 = sphi 0, %s162
      %s164 = sphi 0, %s162
      %s165 = sphi 0, %s164
      %s179 = sphi 0, %s165
      %s183 = sphi 0, %s183
      %s185 = sphi 0, %s183
      %s186 = sphi 0, %s185
      %s200 = sphi 0, %s186
      %s204 = sphi 0, %s204
      %s206 = sphi 0, %s204
      %s207 = sphi 0, %s206
      %s221 = sphi 0, %s207
      %s225 = sphi 0, %s225
      %s227 = sphi 0, %s225
      %s228 = sphi 0, %s227
      %s242 = sphi 0, %s228
      %s246 = sphi 0, %s246
      %s248 = sphi 0, %s246
      %s249 = sphi 0, %s248
      %s263 = sphi 0, %s249
      %s267 = sphi 0, %s267
      %s269 = sphi 0, %s267
      %s270 = sphi 0, %s269
      %s284 = sphi 0, %s270
      %s288 = sphi 0, %s288
      %s290 = sphi 0, %s288
      %s291 = sphi 0, %s290
      %s305 = sphi 0, %s291
      %s309 = sphi 0, %s309
      %s311 = sphi 0, %s309
      %s312 = sphi 0, %s311
      %s326 = sphi 0, %s312
      %s330 = sphi 0, %s330
      %s332 = sphi 0, %s330
      %s333 = sphi 0, %s332
      %s347 = sphi 0, %s333
      %s351 = sphi 0, %s351
      %s353 = sphi 0, %s351
      %s354 = sphi 0, %s353
      %s368 = sphi 0, %s354
      %s380 = sphi 0, %s382
      %s383 = sphi 0, %s380
      %s384 = sphi 0, %s383
      %s400 = sphi 0, %s384
    $region4: #{tpu_custom_call.1} parent=1 // loop_header_branch
      %30 = sbr.rel (%p28) target = $region8
    $region5: #{tpu_custom_call.1} parent=1 // loop_body
      %s32 = ssub.s32 %s27, 1
      %s33 = ssub.s32 %s27, 2
      %s43 = sadd.s32 1, %s36
      %p44 = scmp.ge.s32.totalorder %s43, 4
      %s45 = scalar_select %p44, 0, %s43
      %s46 = sadd.s32 1, %s35
      %s47 = scalar_select %p44, %s46, %s35
      %p48 = scmp.ge.s32.totalorder %s47, 3
      %s49 = scalar_select %p48, 0, %s47
      %s50 = sadd.s32 1, %s34
      %s51 = scalar_select %p48, %s50, %s34
      %p52 = scmp.ge.s32.totalorder %s51, 2
      %s53 = scalar_select %p52, 0, %s51
      %s54 = ssub.s32 %s34, %s53
      %s55 = ssub.s32 %s36, %s45
      %s56 = sor.u32 %s54, %s55
      %p57 = scmp.eq.s32.totalorder %s56, 0
      %s59 = sadd.s32 %s58, 1
      %s60 = scalar_select %p57, %s58, %s59
      %p63 = pneg %p57
      %p64 = scmp.eq.s32.totalorder %s27, 23
      %p65 = por %p63, %p64
      %p66 = scmp.ne.s32.totalorder %s58, %s61
      %p67 = scmp.eq.s32.totalorder %s27, 0
      %p68 = por %p66, %p67
      %p69 = scmp.ne.s32.totalorder %s58, %s61
      %p70 = scmp.eq.s32.totalorder %s32, 23
      %p71 = por %p69, %p70
      %p72 = scmp.ne.s32.totalorder %s61, %s62
      %p73 = scmp.eq.s32.totalorder %s32, 0
      %p74 = por %p72, %p73
      %p75 = scmp.ne.s32.totalorder %s61, %s62
      %p76 = scmp.eq.s32.totalorder %s33, 23
      %p77 = por %p75, %p76
      %p79 = scmp.ne.s32.totalorder %s62, %s78
      %p80 = scmp.eq.s32.totalorder %s33, 0
      %p81 = por %p79, %p80
      %s82 = sadd.s32 %s36, 1
      %p83 = scmp.lt.s32.totalorder %s82, 3
      %s84 = scalar_select %p83, %s82, 3
      %p85 = scmp.eq.s32.totalorder %s35, 0
      %s86 = scalar_select %p85, 0, %s84
      %s87 = sadd.s32 %s45, 1
      %p88 = scmp.lt.s32.totalorder %s87, 3
      %s89 = scalar_select %p88, %s87, 3
      %p90 = scmp.eq.s32.totalorder %s49, 0
      %s91 = scalar_select %p90, 0, %s89
      %s92 = ssub.s32 %s34, %s53
      %s93 = ssub.s32 %s86, %s91
      %s94 = sor.u32 %s92, %s93
      %p95 = scmp.eq.s32.totalorder %s94, 0
      %s97 = sadd.s32 %s96, 1
      %s98 = scalar_select %p95, %s96, %s97
      %p101 = pneg %p95
      %p102 = scmp.eq.s32.totalorder %s27, 23
      %p103 = por %p101, %p102
      %p104 = scmp.ne.s32.totalorder %s96, %s99
      %p105 = scmp.eq.s32.totalorder %s27, 0
      %p106 = por %p104, %p105
      %p107 = scmp.ne.s32.totalorder %s96, %s99
      %p108 = scmp.eq.s32.totalorder %s32, 23
      %p109 = por %p107, %p108
      %p110 = scmp.ne.s32.totalorder %s99, %s100
      %p111 = scmp.eq.s32.totalorder %s32, 0
      %p112 = por %p110, %p111
      %p113 = scmp.ne.s32.totalorder %s99, %s100
      %p114 = scmp.eq.s32.totalorder %s33, 23
      %p115 = por %p113, %p114
      %p117 = scmp.ne.s32.totalorder %s100, %s116
      %p118 = scmp.eq.s32.totalorder %s33, 0
      %p119 = por %p117, %p118
      %s121 = sadd.s32 %s120, 1
      %p124 = scmp.eq.s32.totalorder %s27, 23
      %p125 = scmp.ne.s32.totalorder %s120, %s122
      %p126 = scmp.eq.s32.totalorder %s27, 0
      %p127 = por %p125, %p126
      %p128 = scmp.ne.s32.totalorder %s120, %s122
      %p129 = scmp.eq.s32.totalorder %s32, 23
      %p130 = por %p128, %p129
      %p131 = scmp.ne.s32.totalorder %s122, %s123
      %p132 = scmp.eq.s32.totalorder %s32, 0
      %p133 = por %p131, %p132
      %p134 = scmp.ne.s32.totalorder %s122, %s123
      %p135 = scmp.eq.s32.totalorder %s33, 23
      %p136 = por %p134, %p135
      %p138 = scmp.ne.s32.totalorder %s123, %s137
      %p139 = scmp.eq.s32.totalorder %s33, 0
      %p140 = por %p138, %p139
      %s142 = sadd.s32 %s141, 1
      %p145 = scmp.eq.s32.totalorder %s27, 23
      %p146 = scmp.ne.s32.totalorder %s141, %s143
      %p147 = scmp.eq.s32.totalorder %s27, 0
      %p148 = por %p146, %p147
      %p149 = scmp.ne.s32.totalorder %s141, %s143
      %p150 = scmp.eq.s32.totalorder %s32, 23
      %p151 = por %p149, %p150
      %p152 = scmp.ne.s32.totalorder %s143, %s144
      %p153 = scmp.eq.s32.totalorder %s32, 0
      %p154 = por %p152, %p153
      %p155 = scmp.ne.s32.totalorder %s143, %s144
      %p156 = scmp.eq.s32.totalorder %s33, 23
      %p157 = por %p155, %p156
      %p159 = scmp.ne.s32.totalorder %s144, %s158
      %p160 = scmp.eq.s32.totalorder %s33, 0
      %p161 = por %p159, %p160
      %s163 = sadd.s32 %s162, 1
      %p166 = scmp.eq.s32.totalorder %s27, 23
      %p167 = scmp.ne.s32.totalorder %s162, %s164
      %p168 = scmp.eq.s32.totalorder %s27, 0
      %p169 = por %p167, %p168
      %p170 = scmp.ne.s32.totalorder %s162, %s164
      %p171 = scmp.eq.s32.totalorder %s32, 23
      %p172 = por %p170, %p171
      %p173 = scmp.ne.s32.totalorder %s164, %s165
      %p174 = scmp.eq.s32.totalorder %s32, 0
      %p175 = por %p173, %p174
      %p176 = scmp.ne.s32.totalorder %s164, %s165
      %p177 = scmp.eq.s32.totalorder %s33, 23
      %p178 = por %p176, %p177
      %p180 = scmp.ne.s32.totalorder %s165, %s179
      %p181 = scmp.eq.s32.totalorder %s33, 0
      %p182 = por %p180, %p181
      %s184 = sadd.s32 %s183, 1
      %p187 = scmp.eq.s32.totalorder %s27, 23
      %p188 = scmp.ne.s32.totalorder %s183, %s185
      %p189 = scmp.eq.s32.totalorder %s27, 0
      %p190 = por %p188, %p189
      %p191 = scmp.ne.s32.totalorder %s183, %s185
      %p192 = scmp.eq.s32.totalorder %s32, 23
      %p193 = por %p191, %p192
      %p194 = scmp.ne.s32.totalorder %s185, %s186
      %p195 = scmp.eq.s32.totalorder %s32, 0
      %p196 = por %p194, %p195
      %p197 = scmp.ne.s32.totalorder %s185, %s186
      %p198 = scmp.eq.s32.totalorder %s33, 23
      %p199 = por %p197, %p198
      %p201 = scmp.ne.s32.totalorder %s186, %s200
      %p202 = scmp.eq.s32.totalorder %s33, 0
      %p203 = por %p201, %p202
      %s205 = sadd.s32 %s204, 1
      %p208 = scmp.eq.s32.totalorder %s27, 23
      %p209 = scmp.ne.s32.totalorder %s204, %s206
      %p210 = scmp.eq.s32.totalorder %s27, 0
      %p211 = por %p209, %p210
      %p212 = scmp.ne.s32.totalorder %s204, %s206
      %p213 = scmp.eq.s32.totalorder %s32, 23
      %p214 = por %p212, %p213
      %p215 = scmp.ne.s32.totalorder %s206, %s207
      %p216 = scmp.eq.s32.totalorder %s32, 0
      %p217 = por %p215, %p216
      %p218 = scmp.ne.s32.totalorder %s206, %s207
      %p219 = scmp.eq.s32.totalorder %s33, 23
      %p220 = por %p218, %p219
      %p222 = scmp.ne.s32.totalorder %s207, %s221
      %p223 = scmp.eq.s32.totalorder %s33, 0
      %p224 = por %p222, %p223
      %s226 = sadd.s32 %s225, 1
      %p229 = scmp.eq.s32.totalorder %s27, 23
      %p230 = scmp.ne.s32.totalorder %s225, %s227
      %p231 = scmp.eq.s32.totalorder %s27, 0
      %p232 = por %p230, %p231
      %p233 = scmp.ne.s32.totalorder %s225, %s227
      %p234 = scmp.eq.s32.totalorder %s32, 23
      %p235 = por %p233, %p234
      %p236 = scmp.ne.s32.totalorder %s227, %s228
      %p237 = scmp.eq.s32.totalorder %s32, 0
      %p238 = por %p236, %p237
      %p239 = scmp.ne.s32.totalorder %s227, %s228
      %p240 = scmp.eq.s32.totalorder %s33, 23
      %p241 = por %p239, %p240
      %p243 = scmp.ne.s32.totalorder %s228, %s242
      %p244 = scmp.eq.s32.totalorder %s33, 0
      %p245 = por %p243, %p244
      %s247 = sadd.s32 %s246, 1
      %p250 = scmp.eq.s32.totalorder %s27, 23
      %p251 = scmp.ne.s32.totalorder %s246, %s248
      %p252 = scmp.eq.s32.totalorder %s27, 0
      %p253 = por %p251, %p252
      %p254 = scmp.ne.s32.totalorder %s246, %s248
      %p255 = scmp.eq.s32.totalorder %s32, 23
      %p256 = por %p254, %p255
      %p257 = scmp.ne.s32.totalorder %s248, %s249
      %p258 = scmp.eq.s32.totalorder %s32, 0
      %p259 = por %p257, %p258
      %p260 = scmp.ne.s32.totalorder %s248, %s249
      %p261 = scmp.eq.s32.totalorder %s33, 23
      %p262 = por %p260, %p261
      %p264 = scmp.ne.s32.totalorder %s249, %s263
      %p265 = scmp.eq.s32.totalorder %s33, 0
      %p266 = por %p264, %p265
      %s268 = sadd.s32 %s267, 1
      %p271 = scmp.eq.s32.totalorder %s27, 23
      %p272 = scmp.ne.s32.totalorder %s267, %s269
      %p273 = scmp.eq.s32.totalorder %s27, 0
      %p274 = por %p272, %p273
      %p275 = scmp.ne.s32.totalorder %s267, %s269
      %p276 = scmp.eq.s32.totalorder %s32, 23
      %p277 = por %p275, %p276
      %p278 = scmp.ne.s32.totalorder %s269, %s270
      %p279 = scmp.eq.s32.totalorder %s32, 0
      %p280 = por %p278, %p279
      %p281 = scmp.ne.s32.totalorder %s269, %s270
      %p282 = scmp.eq.s32.totalorder %s33, 23
      %p283 = por %p281, %p282
      %p285 = scmp.ne.s32.totalorder %s270, %s284
      %p286 = scmp.eq.s32.totalorder %s33, 0
      %p287 = por %p285, %p286
      %s289 = sadd.s32 %s288, 1
      %p292 = scmp.eq.s32.totalorder %s27, 23
      %p293 = scmp.ne.s32.totalorder %s288, %s290
      %p294 = scmp.eq.s32.totalorder %s27, 0
      %p295 = por %p293, %p294
      %p296 = scmp.ne.s32.totalorder %s288, %s290
      %p297 = scmp.eq.s32.totalorder %s32, 23
      %p298 = por %p296, %p297
      %p299 = scmp.ne.s32.totalorder %s290, %s291
      %p300 = scmp.eq.s32.totalorder %s32, 0
      %p301 = por %p299, %p300
      %p302 = scmp.ne.s32.totalorder %s290, %s291
      %p303 = scmp.eq.s32.totalorder %s33, 23
      %p304 = por %p302, %p303
      %p306 = scmp.ne.s32.totalorder %s291, %s305
      %p307 = scmp.eq.s32.totalorder %s33, 0
      %p308 = por %p306, %p307
      %s310 = sadd.s32 %s309, 1
      %p313 = scmp.eq.s32.totalorder %s27, 23
      %p314 = scmp.ne.s32.totalorder %s309, %s311
      %p315 = scmp.eq.s32.totalorder %s27, 0
      %p316 = por %p314, %p315
      %p317 = scmp.ne.s32.totalorder %s309, %s311
      %p318 = scmp.eq.s32.totalorder %s32, 23
      %p319 = por %p317, %p318
      %p320 = scmp.ne.s32.totalorder %s311, %s312
      %p321 = scmp.eq.s32.totalorder %s32, 0
      %p322 = por %p320, %p321
      %p323 = scmp.ne.s32.totalorder %s311, %s312
      %p324 = scmp.eq.s32.totalorder %s33, 23
      %p325 = por %p323, %p324
      %p327 = scmp.ne.s32.totalorder %s312, %s326
      %p328 = scmp.eq.s32.totalorder %s33, 0
      %p329 = por %p327, %p328
      %s331 = sadd.s32 %s330, 1
      %p334 = scmp.eq.s32.totalorder %s27, 23
      %p335 = scmp.ne.s32.totalorder %s330, %s332
      %p336 = scmp.eq.s32.totalorder %s27, 0
      %p337 = por %p335, %p336
      %p338 = scmp.ne.s32.totalorder %s330, %s332
      %p339 = scmp.eq.s32.totalorder %s32, 23
      %p340 = por %p338, %p339
      %p341 = scmp.ne.s32.totalorder %s332, %s333
      %p342 = scmp.eq.s32.totalorder %s32, 0
      %p343 = por %p341, %p342
      %p344 = scmp.ne.s32.totalorder %s332, %s333
      %p345 = scmp.eq.s32.totalorder %s33, 23
      %p346 = por %p344, %p345
      %p348 = scmp.ne.s32.totalorder %s333, %s347
      %p349 = scmp.eq.s32.totalorder %s33, 0
      %p350 = por %p348, %p349
      %s352 = sadd.s32 %s351, 1
      %p355 = scmp.eq.s32.totalorder %s27, 23
      %p356 = scmp.ne.s32.totalorder %s351, %s353
      %p357 = scmp.eq.s32.totalorder %s27, 0
      %p358 = por %p356, %p357
      %p359 = scmp.ne.s32.totalorder %s351, %s353
      %p360 = scmp.eq.s32.totalorder %s32, 23
      %p361 = por %p359, %p360
      %p362 = scmp.ne.s32.totalorder %s353, %s354
      %p363 = scmp.eq.s32.totalorder %s32, 0
      %p364 = por %p362, %p363
      %p365 = scmp.ne.s32.totalorder %s353, %s354
      %p366 = scmp.eq.s32.totalorder %s33, 23
      %p367 = por %p365, %p366
      %p369 = scmp.ne.s32.totalorder %s354, %s368
      %p370 = scmp.eq.s32.totalorder %s33, 0
      %p371 = por %p369, %p370
      %p372 = scmp.eq.s32.totalorder %s35, 2
      %s373 = scalar_select %p372, %s36, 0
      %p374 = scmp.eq.s32.totalorder %s49, 2
      %s375 = scalar_select %p374, %s45, 0
      %s376 = ssub.s32 %s34, %s53
      %s377 = ssub.s32 %s373, %s375
      %s378 = sor.u32 %s376, %s377
      %p379 = scmp.eq.s32.totalorder %s378, 0
      %s381 = sadd.s32 %s380, 1
      %s382 = scalar_select %p379, %s380, %s381
      %p385 = pneg %p379
      %p386 = scmp.eq.s32.totalorder %s27, 23
      %p387 = por %p385, %p386
      %p388 = scmp.ne.s32.totalorder %s380, %s383
      %p389 = scmp.eq.s32.totalorder %s27, 0
      %p390 = por %p388, %p389
      %p391 = scmp.ne.s32.totalorder %s380, %s383
      %p392 = scmp.eq.s32.totalorder %s32, 23
      %p393 = por %p391, %p392
      %p394 = scmp.ne.s32.totalorder %s383, %s384
      %p395 = scmp.eq.s32.totalorder %s32, 0
      %p396 = por %p394, %p395
      %p397 = scmp.ne.s32.totalorder %s383, %s384
      %p398 = scmp.eq.s32.totalorder %s33, 23
      %p399 = por %p397, %p398
      %p401 = scmp.ne.s32.totalorder %s384, %s400
      %p402 = scmp.eq.s32.totalorder %s33, 0
      %p403 = por %p401, %p402
      %p404 = scmp.le.s32.totalorder 1, %s27
      %p405 = scmp.lt.s32.totalorder %s27, 25
      %p406 = pnand %p404, %p405
      %p407 = pneg %p406
      // Predicated region
      $region9: #{tpu_custom_call.1} parent=5 // pred_check
        _
      $region10: #{tpu_custom_call.1} parent=5 // pred_check_branch
        %409 = sbr.rel (%p406) target = $region12
      $region11: #{tpu_custom_call.1} parent=5 // pred_region
        %s410 = ssub.s32 %s27, 1
        // Predicated region
        $region13: #{tpu_custom_call.1} parent=11 // pred_check
          %p411 = pneg %p133
        $region14: #{tpu_custom_call.1} parent=11 // pred_check_branch
          %413 = sbr.rel (%p411) target = $region16
        $region15: #{tpu_custom_call.1} parent=11 // pred_region
          _
        $region16: #{tpu_custom_call.1} parent=11 // pred_fallthru
          _
        // Predicated region
        $region17: #{tpu_custom_call.1} parent=11 // pred_check
          %p414 = pneg %p154
        $region18: #{tpu_custom_call.1} parent=11 // pred_check_branch
          %416 = sbr.rel (%p414) target = $region20
        $region19: #{tpu_custom_call.1} parent=11 // pred_region
          _
        $region20: #{tpu_custom_call.1} parent=11 // pred_fallthru
          _
        // Predicated region
        $region21: #{tpu_custom_call.1} parent=11 // pred_check
          %p417 = pneg %p175
        $region22: #{tpu_custom_call.1} parent=11 // pred_check_branch
          %419 = sbr.rel (%p417) target = $region24
        $region23: #{tpu_custom_call.1} parent=11 // pred_region
          _
        $region24: #{tpu_custom_call.1} parent=11 // pred_fallthru
          _
        // Predicated region
        $region25: #{tpu_custom_call.1} parent=11 // pred_check
          %p420 = pneg %p196
        $region26: #{tpu_custom_call.1} parent=11 // pred_check_branch
          %422 = sbr.rel (%p420) target = $region28
        $region27: #{tpu_custom_call.1} parent=11 // pred_region
          _
        $region28: #{tpu_custom_call.1} parent=11 // pred_fallthru
          _
        // Predicated region
        $region29: #{tpu_custom_call.1} parent=11 // pred_check
          %p423 = pneg %p217
        $region30: #{tpu_custom_call.1} parent=11 // pred_check_branch
          %425 = sbr.rel (%p423) target = $region32
        $region31: #{tpu_custom_call.1} parent=11 // pred_region
          _
        $region32: #{tpu_custom_call.1} parent=11 // pred_fallthru
          _
        // Predicated region
        $region33: #{tpu_custom_call.1} parent=11 // pred_check
          %p426 = pneg %p238
        $region34: #{tpu_custom_call.1} parent=11 // pred_check_branch
          %428 = sbr.rel (%p426) target = $region36
        $region35: #{tpu_custom_call.1} parent=11 // pred_region
          _
        $region36: #{tpu_custom_call.1} parent=11 // pred_fallthru
          _
        // Predicated region
        $region37: #{tpu_custom_call.1} parent=11 // pred_check
          %p429 = pneg %p259
        $region38: #{tpu_custom_call.1} parent=11 // pred_check_branch
          %431 = sbr.rel (%p429) target = $region40
        $region39: #{tpu_custom_call.1} parent=11 // pred_region
          _
        $region40: #{tpu_custom_call.1} parent=11 // pred_fallthru
          _
        // Predicated region
        $region41: #{tpu_custom_call.1} parent=11 // pred_check
          %p432 = pneg %p280
        $region42: #{tpu_custom_call.1} parent=11 // pred_check_branch
          %434 = sbr.rel (%p432) target = $region44
        $region43: #{tpu_custom_call.1} parent=11 // pred_region
          _
        $region44: #{tpu_custom_call.1} parent=11 // pred_fallthru
          _
        // Predicated region
        $region45: #{tpu_custom_call.1} parent=11 // pred_check
          %p435 = pneg %p301
        $region46: #{tpu_custom_call.1} parent=11 // pred_check_branch
          %437 = sbr.rel (%p435) target = $region48
        $region47: #{tpu_custom_call.1} parent=11 // pred_region
          _
        $region48: #{tpu_custom_call.1} parent=11 // pred_fallthru
          _
        // Predicated region
        $region49: #{tpu_custom_call.1} parent=11 // pred_check
          %p438 = pneg %p322
        $region50: #{tpu_custom_call.1} parent=11 // pred_check_branch
          %440 = sbr.rel (%p438) target = $region52
        $region51: #{tpu_custom_call.1} parent=11 // pred_region
          _
        $region52: #{tpu_custom_call.1} parent=11 // pred_fallthru
          _
        // Predicated region
        $region53: #{tpu_custom_call.1} parent=11 // pred_check
          %p441 = pneg %p343
        $region54: #{tpu_custom_call.1} parent=11 // pred_check_branch
          %443 = sbr.rel (%p441) target = $region56
        $region55: #{tpu_custom_call.1} parent=11 // pred_region
          _
        $region56: #{tpu_custom_call.1} parent=11 // pred_fallthru
          _
        // Predicated region
        $region57: #{tpu_custom_call.1} parent=11 // pred_check
          %p444 = pneg %p364
        $region58: #{tpu_custom_call.1} parent=11 // pred_check_branch
          %446 = sbr.rel (%p444) target = $region60
        $region59: #{tpu_custom_call.1} parent=11 // pred_region
          _
        $region60: #{tpu_custom_call.1} parent=11 // pred_fallthru
          _
      $region12: #{tpu_custom_call.1} parent=5 // pred_fallthru
        _
      %p447 = scmp.lt.s32.totalorder %s27, 24
      // Predicated region
      $region61: #{tpu_custom_call.1} parent=5 // pred_check
        %p448 = pneg %p447
      $region62: #{tpu_custom_call.1} parent=5 // pred_check_branch
        %450 = sbr.rel (%p448) target = $region64
      $region63: #{tpu_custom_call.1} parent=5 // pred_region
        // Predicated region
        $region65: #{tpu_custom_call.1} parent=63 // pred_check
          %p451 = pneg %p68
        $region66: #{tpu_custom_call.1} parent=63 // pred_check_branch
          %453 = sbr.rel (%p451) target = $region68
        $region67: #{tpu_custom_call.1} parent=63 // pred_region
          %s454 = sand.u32 %s58, 1
          %s455 = sand.u32 %s58, 1
          %s456 = smul.addr %s455, 16
          %s457 = scalar_lea.vmem [#allocation6], %s456
          %s458 = smul.addr %s34, 8
          %s459 = sadd.s32 %s36, %s458
          %s460 = smul.addr %s459, 8
          %s461 = scalar_lea.vmem %s0, %s460
          // Predicated region
          $region69: #{tpu_custom_call.1} parent=67 // pred_check
            _
          $region70: #{tpu_custom_call.1} parent=67 // pred_check_branch
            %463 = sbr.rel (0) target = $region72
          $region71: #{tpu_custom_call.1} parent=67 // pred_region
            // Predicated region
            $region73: #{tpu_custom_call.1} parent=71 // pred_check
              _
            $region74: #{tpu_custom_call.1} parent=71 // pred_check_branch
              %465 = sbr.rel (0) target = $region76
            $region75: #{tpu_custom_call.1} parent=71 // pred_region
              // Predicated region
              $region88: #{tpu_custom_call.1} parent=75 // pred_check
                _
              $region89: #{tpu_custom_call.1} parent=75 // pred_check_branch
                %482 = sbr.rel (0) target = $region91
              $region90: #{tpu_custom_call.1} parent=75 // pred_region
                loop: start=0, step=1, limit=1
                $region92: #{tpu_custom_call.1} parent=90 // loop_pre_header
                  _
                $region93: #{tpu_custom_call.1} parent=90 // loop_header
                  %s484 = sphi 0, %s488
                  %p485 = scmp.ge.s32.totalorder %s484, 1
                  %s489 = sphi %s461, %s461
                  %s490 = sphi %s457, %s457
                $region94: #{tpu_custom_call.1} parent=90 // loop_header_branch
                  %487 = sbr.rel (%p485) target = $region98
                $region95: #{tpu_custom_call.1} parent=90 // loop_body
                  %v491 = vld [vmem:[%s489] sm:$0xff]
                  %492 = vst [vmem:[%s490] sm:$0xff] %v491
                  %v493 = vld [vmem:[%s489 + $0x20] sm:$0xff]
                  %494 = vst [vmem:[%s490 + $0x8] sm:$0xff] %v493
                $region96: #{tpu_custom_call.1} parent=90 // loop_footer
                  %s488 = sadd.s32 1, %s484
                $region97: #{tpu_custom_call.1} parent=90 // loop_footer_branch
                  %483 = sbr.rel target = $region93
                $region98: #{tpu_custom_call.1} parent=90 // loop_exit
                  _
              $region91: #{tpu_custom_call.1} parent=75 // pred_fallthru
                _
              // Predicated region
              $region99: #{tpu_custom_call.1} parent=75 // pred_check
                _
              $region100: #{tpu_custom_call.1} parent=75 // pred_check_branch
                %496 = sbr.rel target = $region102
              $region101: #{tpu_custom_call.1} parent=75 // pred_region
                _
              $region102: #{tpu_custom_call.1} parent=75 // pred_fallthru
                _
            $region76: #{tpu_custom_call.1} parent=71 // pred_fallthru
              _
            // Predicated region
            $region77: #{tpu_custom_call.1} parent=71 // pred_check
              _
            $region78: #{tpu_custom_call.1} parent=71 // pred_check_branch
              %467 = sbr.rel target = $region80
            $region79: #{tpu_custom_call.1} parent=71 // pred_region
              loop: start=0, step=1, limit=1
              $region81: #{tpu_custom_call.1} parent=79 // loop_pre_header
                _
              $region82: #{tpu_custom_call.1} parent=79 // loop_header
                %s470 = sphi 0, %s474
                %p471 = scmp.ge.s32.totalorder %s470, 1
                %s475 = sphi %s461, %s461
                %s476 = sphi %s457, %s457
              $region83: #{tpu_custom_call.1} parent=79 // loop_header_branch
                %473 = sbr.rel (%p471) target = $region87
              $region84: #{tpu_custom_call.1} parent=79 // loop_body
                %v477 = vld [vmem:[%s475] sm:$0xff]
                %478 = vst [vmem:[%s476] sm:$0xff] %v477
                %v479 = vld [vmem:[%s475 + $0x20] sm:$0xff]
                %480 = vst [vmem:[%s476 + $0x8] sm:$0xff] %v479
              $region85: #{tpu_custom_call.1} parent=79 // loop_footer
                %s474 = sadd.s32 1, %s470
              $region86: #{tpu_custom_call.1} parent=79 // loop_footer_branch
                %469 = sbr.rel target = $region82
              $region87: #{tpu_custom_call.1} parent=79 // loop_exit
                _
            $region80: #{tpu_custom_call.1} parent=71 // pred_fallthru
              _
          $region72: #{tpu_custom_call.1} parent=67 // pred_fallthru
            _
          %497 = vnop
        $region68: #{tpu_custom_call.1} parent=63 // pred_fallthru
          _
        // Predicated region
        $region103: #{tpu_custom_call.1} parent=63 // pred_check
          %p498 = pneg %p106
        $region104: #{tpu_custom_call.1} parent=63 // pred_check_branch
          %500 = sbr.rel (%p498) target = $region106
        $region105: #{tpu_custom_call.1} parent=63 // pred_region
          %s501 = sand.u32 %s96, 1
          %s502 = sand.u32 %s96, 1
          %s503 = smul.addr %s502, 16
          %s504 = scalar_lea.vmem [#allocation7], %s503
          %s505 = sadd.s32 %s36, 1
          %p506 = scmp.lt.s32.totalorder %s505, 3
          %s507 = scalar_select %p506, %s505, 3
          %p508 = scmp.eq.s32.totalorder %s35, 0
          %s509 = scalar_select %p508, 0, %s507
          %s510 = smul.addr %s34, 8
          %s511 = sadd.s32 %s509, %s510
          %s512 = smul.addr %s511, 8
          %s513 = scalar_lea.vmem %s1, %s512
          // Predicated region
          $region107: #{tpu_custom_call.1} parent=105 // pred_check
            _
          $region108: #{tpu_custom_call.1} parent=105 // pred_check_branch
            %515 = sbr.rel (0) target = $region110
          $region109: #{tpu_custom_call.1} parent=105 // pred_region
            // Predicated region
            $region111: #{tpu_custom_call.1} parent=109 // pred_check
              _
            $region112: #{tpu_custom_call.1} parent=109 // pred_check_branch
              %517 = sbr.rel (0) target = $region114
            $region113: #{tpu_custom_call.1} parent=109 // pred_region
              // Predicated region
              $region126: #{tpu_custom_call.1} parent=113 // pred_check
                _
              $region127: #{tpu_custom_call.1} parent=113 // pred_check_branch
                %534 = sbr.rel (0) target = $region129
              $region128: #{tpu_custom_call.1} parent=113 // pred_region
                loop: start=0, step=1, limit=1
                $region130: #{tpu_custom_call.1} parent=128 // loop_pre_header
                  _
                $region131: #{tpu_custom_call.1} parent=128 // loop_header
                  %s536 = sphi 0, %s540
                  %p537 = scmp.ge.s32.totalorder %s536, 1
                  %s541 = sphi %s513, %s513
                  %s542 = sphi %s504, %s504
                $region132: #{tpu_custom_call.1} parent=128 // loop_header_branch
                  %539 = sbr.rel (%p537) target = $region136
                $region133: #{tpu_custom_call.1} parent=128 // loop_body
                  %v543 = vld [vmem:[%s541] sm:$0xff]
                  %544 = vst [vmem:[%s542] sm:$0xff] %v543
                  %v545 = vld [vmem:[%s541 + $0x20] sm:$0xff]
                  %546 = vst [vmem:[%s542 + $0x8] sm:$0xff] %v545
                $region134: #{tpu_custom_call.1} parent=128 // loop_footer
                  %s540 = sadd.s32 1, %s536
                $region135: #{tpu_custom_call.1} parent=128 // loop_footer_branch
                  %535 = sbr.rel target = $region131
                $region136: #{tpu_custom_call.1} parent=128 // loop_exit
                  _
              $region129: #{tpu_custom_call.1} parent=113 // pred_fallthru
                _
              // Predicated region
              $region137: #{tpu_custom_call.1} parent=113 // pred_check
                _
              $region138: #{tpu_custom_call.1} parent=113 // pred_check_branch
                %548 = sbr.rel target = $region140
              $region139: #{tpu_custom_call.1} parent=113 // pred_region
                _
              $region140: #{tpu_custom_call.1} parent=113 // pred_fallthru
                _
            $region114: #{tpu_custom_call.1} parent=109 // pred_fallthru
              _
            // Predicated region
            $region115: #{tpu_custom_call.1} parent=109 // pred_check
              _
            $region116: #{tpu_custom_call.1} parent=109 // pred_check_branch
              %519 = sbr.rel target = $region118
            $region117: #{tpu_custom_call.1} parent=109 // pred_region
              loop: start=0, step=1, limit=1
              $region119: #{tpu_custom_call.1} parent=117 // loop_pre_header
                _
              $region120: #{tpu_custom_call.1} parent=117 // loop_header
                %s522 = sphi 0, %s526
                %p523 = scmp.ge.s32.totalorder %s522, 1
                %s527 = sphi %s513, %s513
                %s528 = sphi %s504, %s504
              $region121: #{tpu_custom_call.1} parent=117 // loop_header_branch
                %525 = sbr.rel (%p523) target = $region125
              $region122: #{tpu_custom_call.1} parent=117 // loop_body
                %v529 = vld [vmem:[%s527] sm:$0xff]
                %530 = vst [vmem:[%s528] sm:$0xff] %v529
                %v531 = vld [vmem:[%s527 + $0x20] sm:$0xff]
                %532 = vst [vmem:[%s528 + $0x8] sm:$0xff] %v531
              $region123: #{tpu_custom_call.1} parent=117 // loop_footer
                %s526 = sadd.s32 1, %s522
              $region124: #{tpu_custom_call.1} parent=117 // loop_footer_branch
                %521 = sbr.rel target = $region120
              $region125: #{tpu_custom_call.1} parent=117 // loop_exit
                _
            $region118: #{tpu_custom_call.1} parent=109 // pred_fallthru
              _
          $region110: #{tpu_custom_call.1} parent=105 // pred_fallthru
            _
          %549 = vnop
        $region106: #{tpu_custom_call.1} parent=63 // pred_fallthru
          _
      $region64: #{tpu_custom_call.1} parent=5 // pred_fallthru
        _
      %p550 = scmp.le.s32.totalorder 1, %s27
      %p551 = scmp.lt.s32.totalorder %s27, 25
      %p552 = pnand %p550, %p551
      %p553 = pneg %p552
      // Predicated region
      $region141: #{tpu_custom_call.1} parent=5 // pred_check
        _
      $region142: #{tpu_custom_call.1} parent=5 // pred_check_branch
        %555 = sbr.rel (%p552) target = $region144
      $region143: #{tpu_custom_call.1} parent=5 // pred_region
        %s556 = ssub.s32 %s27, 1
        %s557 = sand.u32 %s61, 1
        %s558 = sand.u32 %s61, 1
        %s559 = smul.addr %s558, 16
        %s560 = scalar_lea.vmem [#allocation6], %s559
        // Predicated region
        $region145: #{tpu_custom_call.1} parent=143 // pred_check
          %p561 = pneg %p74
        $region146: #{tpu_custom_call.1} parent=143 // pred_check_branch
          %563 = sbr.rel (%p561) target = $region148
        $region147: #{tpu_custom_call.1} parent=143 // pred_region
          _
        $region148: #{tpu_custom_call.1} parent=143 // pred_fallthru
          _
        %s564 = sand.u32 %s99, 1
        %s565 = sand.u32 %s99, 1
        %s566 = smul.addr %s565, 16
        %s567 = scalar_lea.vmem [#allocation7], %s566
        // Predicated region
        $region149: #{tpu_custom_call.1} parent=143 // pred_check
          %p568 = pneg %p112
        $region150: #{tpu_custom_call.1} parent=143 // pred_check_branch
          %570 = sbr.rel (%p568) target = $region152
        $region151: #{tpu_custom_call.1} parent=143 // pred_region
          _
        $region152: #{tpu_custom_call.1} parent=143 // pred_fallthru
          _
        %s571 = sand.u32 %s61, 1
        %s572 = sand.u32 %s61, 1
        %s573 = smul.addr %s572, 16
        %s574 = scalar_lea.vmem [#allocation6], %s573
        %p575 = pneg %p74
        %p576 = pneg %p71
        %s577 = sand.u32 %s99, 1
        %s578 = sand.u32 %s99, 1
        %s579 = smul.addr %s578, 16
        %s580 = scalar_lea.vmem [#allocation7], %s579
        %p581 = pneg %p112
        %p582 = pneg %p109
        %p583 = pneg %p133
        %p584 = pneg %p130
        %p585 = pneg %p154
        %p586 = pneg %p151
        %p587 = pneg %p175
        %p588 = pneg %p172
        %p589 = pneg %p196
        %p590 = pneg %p193
        %p591 = pneg %p217
        %p592 = pneg %p214
        %p593 = pneg %p238
        %p594 = pneg %p235
        %p595 = pneg %p259
        %p596 = pneg %p256
        %p597 = pneg %p280
        %p598 = pneg %p277
        %p599 = pneg %p301
        %p600 = pneg %p298
        %p601 = pneg %p322
        %p602 = pneg %p319
        %p603 = pneg %p343
        %p604 = pneg %p340
        %p605 = pneg %p364
        %p606 = pneg %p361
        %p607 = pneg %p396
        %p608 = pneg %p393
        %s609 = sand.u32 %s383, 1
        %s610 = scalar_lea.sflag [#allocation9], %s609
        %s611 = sand.u32 %s383, 1
        %s612 = smul.addr %s611, 16
        %s613 = scalar_lea.vmem [#allocation8], %s612
        %s614 = sadd.s32 %s39, 1
        %p615 = scmp.lt.s32.totalorder %s614, 3
        %s616 = scalar_select %p615, %s614, 3
        %p617 = scmp.eq.s32.totalorder %s38, 0
        %s618 = scalar_select %p617, 0, %s616
        %p619 = scmp.eq.s32.totalorder %s38, 2
        %s620 = scalar_select %p619, %s39, 0
        %v621 = vld [vmem:[%s560] sm:$0xff]
        %v622 = vld [vmem:[%s560 + $0x8] sm:$0xff]
        %v623 = vld [vmem:[%s2] sm:$0xff]
        %v624 = vld [vmem:[%s2 + $0x8] sm:$0xff]
        %v625 = vld [vmem:[%s2 + $0x10] sm:$0xff]
        %v626 = vld [vmem:[%s2 + $0x18] sm:$0xff]
        %v627 = vld [vmem:[%s3] sm:$0xff]
        %v628 = vld [vmem:[%s3 + $0x8] sm:$0xff]
        %v629 = vld [vmem:[%s3 + $0x10] sm:$0xff]
        %v630 = vld [vmem:[%s3 + $0x18] sm:$0xff]
        %v631 = vld [vmem:[#allocation4] sm:$0x1]
        %p632 = scmp.eq.s32.totalorder %s38, 0
        // Predicated region
        $region153: #{tpu_custom_call.1} parent=143 // pred_check
          %p633 = pneg %p632
        $region154: #{tpu_custom_call.1} parent=143 // pred_check_branch
          %635 = sbr.rel (%p633) target = $region156
        $region155: #{tpu_custom_call.1} parent=143 // pred_region
          %p636 = scmp.eq.s32.totalorder %s39, 0
          // Predicated region
          $region157: #{tpu_custom_call.1} parent=155 // pred_check
            %p637 = pneg %p636
          $region158: #{tpu_custom_call.1} parent=155 // pred_check_branch
            %639 = sbr.rel (%p637) target = $region160
          $region159: #{tpu_custom_call.1} parent=155 // pred_region
            %640 = vst [vmem:[#allocation2] sm:$0x3] 0.0
            %vm641 = vcmask 15360
            %642 = vst.msk [vmem:[#allocation3] sm:$0xff] %vm641, 0.0
            %643 = vst.msk [vmem:[#allocation3 + $0x8] sm:$0xff] %vm641, 0.0
            %644 = vst.msk [vmem:[#allocation3 + $0x10] sm:$0xff] %vm641, 0.0
            %645 = vst.msk [vmem:[#allocation3 + $0x18] sm:$0xff] %vm641, 0.0
          $region160: #{tpu_custom_call.1} parent=155 // pred_fallthru
            _
          %647 = vset.pattern.permute.xlu0 0
          %648 = vperm.xlu0 %647, %v627
          %v649 = vpop.permute.xlu0 %648
          %652 = vset.pattern.permute.xlu0 0
          %653 = vperm.xlu0 %652, %v628
          %v654 = vpop.permute.xlu0 %653
          %657 = vset.pattern.permute.xlu0 0
          %658 = vperm.xlu0 %657, %v629
          %v659 = vpop.permute.xlu0 %658
          %662 = vset.pattern.permute.xlu0 0
          %663 = vperm.xlu0 %662, %v630
          %v664 = vpop.permute.xlu0 %663
          %vm666 = vcmask 130048
          %v668 = vsel %vm666, %v623, 0
          %v671 = vsel %vm666, %v624, 0
          %v674 = vsel %vm666, %v625, 0
          %v677 = vsel %vm666, %v626, 0
          %679 = vmatprep.subr.mxu0 0.0
          %680 = vmatpush1.msra.mxu0 %v621
          %681 = vmatprep.subr.mxu0 0.0
          %682 = vmatpush1.msra.mxu0 %v622
          %683 = vmatprep.subr.mxu0 0.0
          %684 = vmatpush1.msra.mxu0 0.0
          %685 = vmatprep.subr.mxu0 0.0
          %686 = vmatpush1.msra.mxu0 0.0
          %687 = vmatprep.subr.mxu0 0.0
          %688 = vmatpush1.msra.mxu0 0.0
          %689 = vmatprep.subr.mxu0 0.0
          %690 = vmatpush1.msra.mxu0 0.0
          %691 = vmatprep.subr.mxu0 0.0
          %692 = vmatpush1.msra.mxu0 0.0
          %693 = vmatprep.subr.mxu0 0.0
          %694 = vmatpush1.msra.mxu0 0.0
          %695 = vmatprep.subr.mxu0 0.0
          %696 = vmatpush1.msra.mxu0 0.0
          %697 = vmatprep.subr.mxu0 0.0
          %698 = vmatpush1.msra.mxu0 0.0
          %699 = vmatprep.subr.mxu0 0.0
          %700 = vmatpush1.msra.mxu0 0.0
          %701 = vmatprep.subr.mxu0 0.0
          %702 = vmatpush1.msra.mxu0 0.0
          %703 = vmatprep.subr.mxu0 0.0
          %704 = vmatpush1.msra.mxu0 0.0
          %705 = vmatprep.subr.mxu0 0.0
          %706 = vmatpush1.msra.mxu0 0.0
          %707 = vmatprep.subr.mxu0 0.0
          %708 = vmatpush1.msra.mxu0 0.0
          %709 = vmatprep.subr.mxu0 0.0
          %710 = vmatpush1.msra.mxu0 0.0
          %711 = vmatprep.subr.mxu0 0.0
          %712 = vmatpush1.msra.mxu0 0.0
          %713 = vmatprep.subr.mxu0 0.0
          %714 = vmatpush1.msra.mxu0 0.0
          %715 = vmatprep.subr.mxu0 0.0
          %716 = vmatpush1.msra.mxu0 0.0
          %717 = vmatprep.subr.mxu0 0.0
          %718 = vmatpush1.msra.mxu0 0.0
          %719 = vmatprep.subr.mxu0 0.0
          %720 = vmatpush1.msra.mxu0 0.0
          %721 = vmatprep.subr.mxu0 0.0
          %722 = vmatpush1.msra.mxu0 0.0
          %723 = vmatprep.subr.mxu0 0.0
          %724 = vmatpush1.msra.mxu0 0.0
          %725 = vmatprep.subr.mxu0 0.0
          %726 = vmatpush1.msra.mxu0 0.0
          %727 = vmatprep.subr.mxu0 0.0
          %728 = vmatpush1.msra.mxu0 0.0
          %729 = vmatprep.subr.mxu0 0.0
          %730 = vmatpush1.msra.mxu0 0.0
          %731 = vmatprep.subr.mxu0 0.0
          %732 = vmatpush1.msra.mxu0 0.0
          %733 = vmatprep.subr.mxu0 0.0
          %734 = vmatpush1.msra.mxu0 0.0
          %735 = vmatprep.subr.mxu0 0.0
          %736 = vmatpush1.msra.mxu0 0.0
          %737 = vmatprep.subr.mxu0 0.0
          %738 = vmatpush1.msra.mxu0 0.0
          %739 = vmatprep.subr.mxu0 0.0
          %740 = vmatpush1.msra.mxu0 0.0
          %741 = vmatprep.subr.mxu0 0.0
          %742 = vmatpush1.msra.mxu0 0.0
          %743 = vmatprep.mubr.f32.mxu0 0.0
          %744 = vmatmul.mubr.f32.gmra.mrb[0].mxu0 %v668
          %v745 = vpop.f32.mrb[0].mxu0
          %v746 = vadd.f32 %v649, %v745
          %v747 = vpop.f32.mrb[0].mxu0
          %748 = vmatprep.mubr.f32.mxu0 0.0
          %749 = vmatmul.mubr.f32.gmra.mrb[0].mxu0 %v671
          %v750 = vpop.f32.mrb[0].mxu0
          %v751 = vadd.f32 %v654, %v750
          %v752 = vpop.f32.mrb[0].mxu0
          %753 = vmatprep.mubr.f32.mxu0 0.0
          %754 = vmatmul.mubr.f32.gmra.mrb[0].mxu0 %v674
          %v755 = vpop.f32.mrb[0].mxu0
          %v756 = vadd.f32 %v659, %v755
          %v757 = vpop.f32.mrb[0].mxu0
          %758 = vmatprep.mubr.f32.mxu0 0.0
          %759 = vmatmul.mubr.f32.gmra.mrb[0].mxu0 %v677
          %v760 = vpop.f32.mrb[0].mxu0
          %v761 = vadd.f32 %v664, %v760
          %v762 = vpop.f32.mrb[0].mxu0
          %763 = vdwg.mxu0
          %vm764 = vcmp.gt.f32.partialorder %v746, 0.0
          %vm765 = vcmp.gt.f32.partialorder %v751, 0.0
          %vm766 = vcmp.gt.f32.partialorder %v756, 0.0
          %vm767 = vcmp.gt.f32.partialorder %v761, 0.0
          %v769 = vlaneseq
          %v770 = vshrl.u32 %v769, 7
          %v771 = vsub.s32 0, %v770
          %v772 = vrot.slane %v631, %v771
          %773 = vset.pattern.permute.xlu0 0
          %774 = vperm.xlu0 %773, %v772
          %v775 = vpop.permute.xlu0 %774
          %v777 = vmul.f32 %v775, %v746
          %v778 = vmul.f32 %v775, %v751
          %v779 = vmul.f32 %v775, %v756
          %v780 = vmul.f32 %v775, %v761
          %v781 = vsel %vm764, %v746, %v777
          %v782 = vsel %vm765, %v751, %v778
          %v783 = vsel %vm766, %v756, %v779
          %v784 = vsel %vm767, %v761, %v780
          %v785 = vld [vmem:[#allocation2] sm:$0x1]
          %v786 = vadd.f32 %v781, %v782
          %v787 = vadd.f32 %v786, %v783
          %v788 = vadd.f32 %v787, %v784
          %v789 = vrot.slane %v788, 4
          %v790 = vadd.f32 %v788, %v789
          %v791 = vrot.slane %v790, 2
          %v792 = vadd.f32 %v790, %v791
          %v793 = vrot.slane %v792, 1
          %v794 = vadd.f32 %v792, %v793
          %v795 = vadd.f32 %v785, %v794
          %796 = vst [vmem:[#allocation2] sm:$0x1] %v795
          %v797 = vld [vmem:[#allocation2 + $0x1] sm:$0x1]
          %v798 = vmul.f32 %v781, %v781
          %v799 = vmul.f32 %v782, %v782
          %v800 = vmul.f32 %v783, %v783
          %v801 = vmul.f32 %v784, %v784
          %v802 = vadd.f32 %v798, %v799
          %v803 = vadd.f32 %v802, %v800
          %v804 = vadd.f32 %v803, %v801
          %v805 = vrot.slane %v804, 4
          %v806 = vadd.f32 %v804, %v805
          %v807 = vrot.slane %v806, 2
          %v808 = vadd.f32 %v806, %v807
          %v809 = vrot.slane %v808, 1
          %v810 = vadd.f32 %v808, %v809
          %v811 = vadd.f32 %v797, %v810
          %812 = vst [vmem:[#allocation2 + $0x1] sm:$0x1] %v811
        $region156: #{tpu_custom_call.1} parent=143 // pred_fallthru
          _
        %p813 = scmp.gt.s32.totalorder %s38, 0
        // Predicated region
        $region161: #{tpu_custom_call.1} parent=143 // pred_check
          %p814 = pneg %p813
        $region162: #{tpu_custom_call.1} parent=143 // pred_check_branch
          %816 = sbr.rel (%p814) target = $region164
        $region163: #{tpu_custom_call.1} parent=143 // pred_region
          %v817 = vld [vmem:[#allocation2] sm:$0x1]
          %vm818 = vcmask 1040384
          %v819 = vsel %vm818, %v817, 0.0
          %820 = vadd.xlane.f32.xlu0 %v819
          %v821 = vpop.xlane.xlu0 %820
          %v822 = vld [vmem:[#allocation2 + $0x1] sm:$0x1]
          %v823 = vsel %vm818, %v822, 0.0
          %824 = vadd.xlane.f32.xlu0 %v823
          %v825 = vpop.xlane.xlu0 %824
          %v826 = vmul.f32 %v821, 6.1035156e-05
          %v827 = vmul.f32 %v825, 6.1035156e-05
          %v828 = vmul.f32 %v826, %v826
          %v829 = vsub.f32 %v827, %v828
          %v830 = vld [vmem:[%s5] sm:$0xff]
          %v831 = vld [vmem:[%s5 + $0x8] sm:$0xff]
          %v832 = vld [vmem:[%s5 + $0x10] sm:$0xff]
          %v833 = vld [vmem:[%s5 + $0x18] sm:$0xff]
          %v834 = vadd.f32 %v829, 1e-05
          %v835 = vrsqrt.pop %v834
          %v836 = vlaneseq
          %v837 = vshrl.u32 %v836, 7
          %v838 = vsub.s32 0, %v837
          %v839 = vrot.slane %v835, %v838
          %v840 = vmul.f32 %v830, %v839
          %v841 = vmul.f32 %v831, %v839
          %v842 = vmul.f32 %v832, %v839
          %v843 = vmul.f32 %v833, %v839
          %v844 = vld [vmem:[%s6] sm:$0xff]
          %v845 = vld [vmem:[%s6 + $0x8] sm:$0xff]
          %v846 = vld [vmem:[%s6 + $0x10] sm:$0xff]
          %v847 = vld [vmem:[%s6 + $0x18] sm:$0xff]
          %v848 = vlaneseq
          %v849 = vshrl.u32 %v848, 7
          %v850 = vsub.s32 0, %v849
          %v851 = vrot.slane %v826, %v850
          %v852 = vmul.f32 %v851, %v840
          %v853 = vmul.f32 %v851, %v841
          %v854 = vmul.f32 %v851, %v842
          %v855 = vmul.f32 %v851, %v843
          %v856 = vsub.f32 %v844, %v852
          %v857 = vsub.f32 %v845, %v853
          %v858 = vsub.f32 %v846, %v854
          %v859 = vsub.f32 %v847, %v855
          %861 = vset.pattern.permute.xlu0 0
          %862 = vperm.xlu0 %861, %v627
          %v863 = vpop.permute.xlu0 %862
          %866 = vset.pattern.permute.xlu0 0
          %867 = vperm.xlu0 %866, %v628
          %v868 = vpop.permute.xlu0 %867
          %871 = vset.pattern.permute.xlu0 0
          %872 = vperm.xlu0 %871, %v629
          %v873 = vpop.permute.xlu0 %872
          %876 = vset.pattern.permute.xlu0 0
          %877 = vperm.xlu0 %876, %v630
          %v878 = vpop.permute.xlu0 %877
          %vm880 = vcmask 130048
          %v882 = vsel %vm880, %v623, 0
          %v885 = vsel %vm880, %v624, 0
          %v888 = vsel %vm880, %v625, 0
          %v891 = vsel %vm880, %v626, 0
          %893 = vmatprep.subr.mxu0 0.0
          %894 = vmatpush1.msra.mxu0 %v621
          %895 = vmatprep.subr.mxu0 0.0
          %896 = vmatpush1.msra.mxu0 %v622
          %897 = vmatprep.subr.mxu0 0.0
          %898 = vmatpush1.msra.mxu0 0.0
          %899 = vmatprep.subr.mxu0 0.0
          %900 = vmatpush1.msra.mxu0 0.0
          %901 = vmatprep.subr.mxu0 0.0
          %902 = vmatpush1.msra.mxu0 0.0
          %903 = vmatprep.subr.mxu0 0.0
          %904 = vmatpush1.msra.mxu0 0.0
          %905 = vmatprep.subr.mxu0 0.0
          %906 = vmatpush1.msra.mxu0 0.0
          %907 = vmatprep.subr.mxu0 0.0
          %908 = vmatpush1.msra.mxu0 0.0
          %909 = vmatprep.subr.mxu0 0.0
          %910 = vmatpush1.msra.mxu0 0.0
          %911 = vmatprep.subr.mxu0 0.0
          %912 = vmatpush1.msra.mxu0 0.0
          %913 = vmatprep.subr.mxu0 0.0
          %914 = vmatpush1.msra.mxu0 0.0
          %915 = vmatprep.subr.mxu0 0.0
          %916 = vmatpush1.msra.mxu0 0.0
          %917 = vmatprep.subr.mxu0 0.0
          %918 = vmatpush1.msra.mxu0 0.0
          %919 = vmatprep.subr.mxu0 0.0
          %920 = vmatpush1.msra.mxu0 0.0
          %921 = vmatprep.subr.mxu0 0.0
          %922 = vmatpush1.msra.mxu0 0.0
          %923 = vmatprep.subr.mxu0 0.0
          %924 = vmatpush1.msra.mxu0 0.0
          %925 = vmatprep.subr.mxu0 0.0
          %926 = vmatpush1.msra.mxu0 0.0
          %927 = vmatprep.subr.mxu0 0.0
          %928 = vmatpush1.msra.mxu0 0.0
          %929 = vmatprep.subr.mxu0 0.0
          %930 = vmatpush1.msra.mxu0 0.0
          %931 = vmatprep.subr.mxu0 0.0
          %932 = vmatpush1.msra.mxu0 0.0
          %933 = vmatprep.subr.mxu0 0.0
          %934 = vmatpush1.msra.mxu0 0.0
          %935 = vmatprep.subr.mxu0 0.0
          %936 = vmatpush1.msra.mxu0 0.0
          %937 = vmatprep.subr.mxu0 0.0
          %938 = vmatpush1.msra.mxu0 0.0
          %939 = vmatprep.subr.mxu0 0.0
          %940 = vmatpush1.msra.mxu0 0.0
          %941 = vmatprep.subr.mxu0 0.0
          %942 = vmatpush1.msra.mxu0 0.0
          %943 = vmatprep.subr.mxu0 0.0
          %944 = vmatpush1.msra.mxu0 0.0
          %945 = vmatprep.subr.mxu0 0.0
          %946 = vmatpush1.msra.mxu0 0.0
          %947 = vmatprep.subr.mxu0 0.0
          %948 = vmatpush1.msra.mxu0 0.0
          %949 = vmatprep.subr.mxu0 0.0
          %950 = vmatpush1.msra.mxu0 0.0
          %951 = vmatprep.subr.mxu0 0.0
          %952 = vmatpush1.msra.mxu0 0.0
          %953 = vmatprep.subr.mxu0 0.0
          %954 = vmatpush1.msra.mxu0 0.0
          %955 = vmatprep.subr.mxu0 0.0
          %956 = vmatpush1.msra.mxu0 0.0
          %957 = vmatprep.mubr.f32.mxu0 0.0
          %958 = vmatmul.mubr.f32.gmra.mrb[0].mxu0 %v882
          %v959 = vpop.f32.mrb[0].mxu0
          %v960 = vadd.f32 %v863, %v959
          %v961 = vpop.f32.mrb[0].mxu0
          %962 = vmatprep.mubr.f32.mxu0 0.0
          %963 = vmatmul.mubr.f32.gmra.mrb[0].mxu0 %v885
          %v964 = vpop.f32.mrb[0].mxu0
          %v965 = vadd.f32 %v868, %v964
          %v966 = vpop.f32.mrb[0].mxu0
          %967 = vmatprep.mubr.f32.mxu0 0.0
          %968 = vmatmul.mubr.f32.gmra.mrb[0].mxu0 %v888
          %v969 = vpop.f32.mrb[0].mxu0
          %v970 = vadd.f32 %v873, %v969
          %v971 = vpop.f32.mrb[0].mxu0
          %972 = vmatprep.mubr.f32.mxu0 0.0
          %973 = vmatmul.mubr.f32.gmra.mrb[0].mxu0 %v891
          %v974 = vpop.f32.mrb[0].mxu0
          %v975 = vadd.f32 %v878, %v974
          %v976 = vpop.f32.mrb[0].mxu0
          %977 = vdwg.mxu0
          %vm978 = vcmp.gt.f32.partialorder %v960, 0.0
          %vm979 = vcmp.gt.f32.partialorder %v965, 0.0
          %vm980 = vcmp.gt.f32.partialorder %v970, 0.0
          %vm981 = vcmp.gt.f32.partialorder %v975, 0.0
          %v983 = vlaneseq
          %v984 = vshrl.u32 %v983, 7
          %v985 = vsub.s32 0, %v984
          %v986 = vrot.slane %v631, %v985
          %987 = vset.pattern.permute.xlu0 0
          %988 = vperm.xlu0 %987, %v986
          %v989 = vpop.permute.xlu0 %988
          %v991 = vmul.f32 %v989, %v960
          %v992 = vmul.f32 %v989, %v965
          %v993 = vmul.f32 %v989, %v970
          %v994 = vmul.f32 %v989, %v975
          %v995 = vsel %vm978, %v960, %v991
          %v996 = vsel %vm979, %v965, %v992
          %v997 = vsel %vm980, %v970, %v993
          %v998 = vsel %vm981, %v975, %v994
          %1000 = vset.pattern.permute.xlu0 0
          %1001 = vperm.xlu0 %1000, %v840
          %v1002 = vpop.permute.xlu0 %1001
          %1005 = vset.pattern.permute.xlu0 0
          %1006 = vperm.xlu0 %1005, %v841
          %v1007 = vpop.permute.xlu0 %1006
          %1010 = vset.pattern.permute.xlu0 0
          %1011 = vperm.xlu0 %1010, %v842
          %v1012 = vpop.permute.xlu0 %1011
          %1015 = vset.pattern.permute.xlu0 0
          %1016 = vperm.xlu0 %1015, %v843
          %v1017 = vpop.permute.xlu0 %1016
          %v1019 = vmul.f32 %v1002, %v995
          %v1020 = vmul.f32 %v1007, %v996
          %v1021 = vmul.f32 %v1012, %v997
          %v1022 = vmul.f32 %v1017, %v998
          %1024 = vset.pattern.permute.xlu0 0
          %1025 = vperm.xlu0 %1024, %v856
          %v1026 = vpop.permute.xlu0 %1025
          %1029 = vset.pattern.permute.xlu0 0
          %1030 = vperm.xlu0 %1029, %v857
          %v1031 = vpop.permute.xlu0 %1030
          %1034 = vset.pattern.permute.xlu0 0
          %1035 = vperm.xlu0 %1034, %v858
          %v1036 = vpop.permute.xlu0 %1035
          %1039 = vset.pattern.permute.xlu0 0
          %1040 = vperm.xlu0 %1039, %v859
          %v1041 = vpop.permute.xlu0 %1040
          %v1043 = vadd.f32 %v1019, %v1026
          %v1044 = vadd.f32 %v1020, %v1031
          %v1045 = vadd.f32 %v1021, %v1036
          %v1046 = vadd.f32 %v1022, %v1041
          %v1047 = vld [vmem:[%s567] sm:$0xff]
          %v1048 = vld [vmem:[%s567 + $0x8] sm:$0xff]
          %1049 = vmatprep.subr.mxu0 0.0
          %1050 = vmatpush1.msra.mxu0 %v1047
          %1051 = vmatprep.subr.mxu0 0.0
          %1052 = vmatpush1.msra.mxu0 %v1048
          %1053 = vmatprep.subr.mxu0 0.0
          %1054 = vmatpush1.msra.mxu0 0.0
          %1055 = vmatprep.subr.mxu0 0.0
          %1056 = vmatpush1.msra.mxu0 0.0
          %1057 = vmatprep.subr.mxu0 0.0
          %1058 = vmatpush1.msra.mxu0 0.0
          %1059 = vmatprep.subr.mxu0 0.0
          %1060 = vmatpush1.msra.mxu0 0.0
          %1061 = vmatprep.subr.mxu0 0.0
          %1062 = vmatpush1.msra.mxu0 0.0
          %1063 = vmatprep.subr.mxu0 0.0
          %1064 = vmatpush1.msra.mxu0 0.0
          %1065 = vmatprep.subr.mxu0 0.0
          %1066 = vmatpush1.msra.mxu0 0.0
          %1067 = vmatprep.subr.mxu0 0.0
          %1068 = vmatpush1.msra.mxu0 0.0
          %1069 = vmatprep.subr.mxu0 0.0
          %1070 = vmatpush1.msra.mxu0 0.0
          %1071 = vmatprep.subr.mxu0 0.0
          %1072 = vmatpush1.msra.mxu0 0.0
          %1073 = vmatprep.subr.mxu0 0.0
          %1074 = vmatpush1.msra.mxu0 0.0
          %1075 = vmatprep.subr.mxu0 0.0
          %1076 = vmatpush1.msra.mxu0 0.0
          %1077 = vmatprep.subr.mxu0 0.0
          %1078 = vmatpush1.msra.mxu0 0.0
          %1079 = vmatprep.subr.mxu0 0.0
          %1080 = vmatpush1.msra.mxu0 0.0
          %1081 = vmatprep.subr.mxu0 0.0
          %1082 = vmatpush1.msra.mxu0 0.0
          %1083 = vmatprep.subr.mxu0 0.0
          %1084 = vmatpush1.msra.mxu0 0.0
          %1085 = vmatprep.subr.mxu0 0.0
          %1086 = vmatpush1.msra.mxu0 0.0
          %1087 = vmatprep.subr.mxu0 0.0
          %1088 = vmatpush1.msra.mxu0 0.0
          %1089 = vmatprep.subr.mxu0 0.0
          %1090 = vmatpush1.msra.mxu0 0.0
          %1091 = vmatprep.subr.mxu0 0.0
          %1092 = vmatpush1.msra.mxu0 0.0
          %1093 = vmatprep.subr.mxu0 0.0
          %1094 = vmatpush1.msra.mxu0 0.0
          %1095 = vmatprep.subr.mxu0 0.0
          %1096 = vmatpush1.msra.mxu0 0.0
          %1097 = vmatprep.subr.mxu0 0.0
          %1098 = vmatpush1.msra.mxu0 0.0
          %1099 = vmatprep.subr.mxu0 0.0
          %1100 = vmatpush1.msra.mxu0 0.0
          %1101 = vmatprep.subr.mxu0 0.0
          %1102 = vmatpush1.msra.mxu0 0.0
          %1103 = vmatprep.subr.mxu0 0.0
          %1104 = vmatpush1.msra.mxu0 0.0
          %1105 = vmatprep.subr.mxu0 0.0
          %1106 = vmatpush1.msra.mxu0 0.0
          %1107 = vmatprep.subr.mxu0 0.0
          %1108 = vmatpush1.msra.mxu0 0.0
          %1109 = vmatprep.subr.mxu0 0.0
          %1110 = vmatpush1.msra.mxu0 0.0
          %1111 = vmatprep.subr.mxu0 0.0
          %1112 = vmatpush1.msra.mxu0 0.0
          %1113 = vmatprep.mubr.f32.mxu0 0.0
          %1114 = vmatmul.mubr.f32.gmra.mrb[0].mxu0 %v882
          %v1115 = vpop.f32.mrb[0].mxu0
          %v1116 = vadd.f32 %v863, %v1115
          %v1117 = vpop.f32.mrb[0].mxu0
          %1118 = vmatprep.mubr.f32.mxu0 0.0
          %1119 = vmatmul.mubr.f32.gmra.mrb[0].mxu0 %v885
          %v1120 = vpop.f32.mrb[0].mxu0
          %v1121 = vadd.f32 %v868, %v1120
          %v1122 = vpop.f32.mrb[0].mxu0
          %1123 = vmatprep.mubr.f32.mxu0 0.0
          %1124 = vmatmul.mubr.f32.gmra.mrb[0].mxu0 %v888
          %v1125 = vpop.f32.mrb[0].mxu0
          %v1126 = vadd.f32 %v873, %v1125
          %v1127 = vpop.f32.mrb[0].mxu0
          %1128 = vmatprep.mubr.f32.mxu0 0.0
          %1129 = vmatmul.mubr.f32.gmra.mrb[0].mxu0 %v891
          %v1130 = vpop.f32.mrb[0].mxu0
          %v1131 = vadd.f32 %v878, %v1130
          %v1132 = vpop.f32.mrb[0].mxu0
          %1133 = vdwg.mxu0
          %vm1134 = vcmp.gt.f32.partialorder %v1116, 0.0
          %vm1135 = vcmp.gt.f32.partialorder %v1121, 0.0
          %vm1136 = vcmp.gt.f32.partialorder %v1126, 0.0
          %vm1137 = vcmp.gt.f32.partialorder %v1131, 0.0
          %v1138 = vmul.f32 %v989, %v1116
          %v1139 = vmul.f32 %v989, %v1121
          %v1140 = vmul.f32 %v989, %v1126
          %v1141 = vmul.f32 %v989, %v1131
          %v1142 = vsel %vm1134, %v1116, %v1138
          %v1143 = vsel %vm1135, %v1121, %v1139
          %v1144 = vsel %vm1136, %v1126, %v1140
          %v1145 = vsel %vm1137, %v1131, %v1141
          %v1146 = vmul.f32 %v1002, %v1142
          %v1147 = vmul.f32 %v1007, %v1143
          %v1148 = vmul.f32 %v1012, %v1144
          %v1149 = vmul.f32 %v1017, %v1145
          %v1150 = vadd.f32 %v1146, %v1026
          %v1151 = vadd.f32 %v1147, %v1031
          %v1152 = vadd.f32 %v1148, %v1036
          %v1153 = vadd.f32 %v1149, %v1041
          %p1154 = scmp.lt.s32.totalorder %s39, 3
          %s1155 = scalar_select %p1154, 1, 0
          %s1156 = scvt.s32.f32 %s1155
          %v1157 = vstv %s1156
          %v1158 = vmul.f32 %v1150, %v1157
          %v1159 = vmul.f32 %v1151, %v1157
          %v1160 = vmul.f32 %v1152, %v1157
          %v1161 = vmul.f32 %v1153, %v1157
          %v1162 = vld [vmem:[#allocation3] sm:$0xff]
          %v1163 = vld [vmem:[#allocation3 + $0x8] sm:$0xff]
          %v1164 = vld [vmem:[#allocation3 + $0x10] sm:$0xff]
          %v1165 = vld [vmem:[#allocation3 + $0x18] sm:$0xff]
          %p1166 = scmp.gt.s32.totalorder %s39, 0
          %s1167 = scalar_select %p1166, 1, 0
          %s1168 = scvt.s32.f32 %s1167
          %v1169 = vstv %s1168
          %v1170 = vmul.f32 %v1162, %v1169
          %v1171 = vmul.f32 %v1163, %v1169
          %v1172 = vmul.f32 %v1164, %v1169
          %v1173 = vmul.f32 %v1165, %v1169
          %1178 = vrot.lane.b32.xlu0 %v1043, 2
          %v1179 = vpop.permute.xlu0 %1178
          %1180 = vrot.lane.b32.xlu0 %v1044, 2
          %v1181 = vpop.permute.xlu0 %1180
          %1182 = vrot.lane.b32.xlu0 %v1045, 2
          %v1183 = vpop.permute.xlu0 %1182
          %1184 = vrot.lane.b32.xlu0 %v1046, 2
          %v1185 = vpop.permute.xlu0 %1184
          %1194 = vrot.lane.b32.xlu0 %v1158, 2
          %v1195 = vpop.permute.xlu0 %1194
          %1196 = vrot.lane.b32.xlu0 %v1159, 2
          %v1197 = vpop.permute.xlu0 %1196
          %1198 = vrot.lane.b32.xlu0 %v1160, 2
          %v1199 = vpop.permute.xlu0 %1198
          %1200 = vrot.lane.b32.xlu0 %v1161, 2
          %v1201 = vpop.permute.xlu0 %1200
          %vm1206 = vcmask 15360
          %v1207 = vsel %vm1206, %v1170, %v1179
          %v1208 = vsel %vm1206, %v1171, %v1181
          %v1209 = vsel %vm1206, %v1172, %v1183
          %v1210 = vsel %vm1206, %v1173, %v1185
          %v1211 = vsel %vm1206, %v1179, %v1195
          %v1212 = vsel %vm1206, %v1181, %v1197
          %v1213 = vsel %vm1206, %v1183, %v1199
          %v1214 = vsel %vm1206, %v1185, %v1201
          %1215 = vst.msk [vmem:[#allocation3] sm:$0xff] %vm1206, %v1179
          %1216 = vst.msk [vmem:[#allocation3 + $0x8] sm:$0xff] %vm1206, %v1181
          %1217 = vst.msk [vmem:[#allocation3 + $0x10] sm:$0xff] %vm1206, %v1183
          %1218 = vst.msk [vmem:[#allocation3 + $0x18] sm:$0xff] %vm1206, %v1185
          %v1219 = vld [vmem:[%s7] sm:$0xff]
          %v1220 = vld [vmem:[%s7 + $0x8] sm:$0xff]
          %v1221 = vld [vmem:[%s7 + $0x10] sm:$0xff]
          %v1222 = vld [vmem:[%s7 + $0x18] sm:$0xff]
          %v1223 = vld [vmem:[%s8] sm:$0xff]
          %v1224 = vld [vmem:[%s8 + $0x8] sm:$0xff]
          %v1225 = vld [vmem:[%s8 + $0x10] sm:$0xff]
          %v1226 = vld [vmem:[%s8 + $0x18] sm:$0xff]
          %1228 = vset.pattern.permute.xlu0 0
          %1229 = vperm.xlu0 %1228, %v1219
          %v1230 = vpop.permute.xlu0 %1229
          %1233 = vset.pattern.permute.xlu0 0
          %1234 = vperm.xlu0 %1233, %v1220
          %v1235 = vpop.permute.xlu0 %1234
          %1238 = vset.pattern.permute.xlu0 0
          %1239 = vperm.xlu0 %1238, %v1221
          %v1240 = vpop.permute.xlu0 %1239
          %1243 = vset.pattern.permute.xlu0 0
          %1244 = vperm.xlu0 %1243, %v1222
          %v1245 = vpop.permute.xlu0 %1244
          %v1247 = vmul.f32 %v1230, %v1207
          %v1248 = vmul.f32 %v1235, %v1208
          %v1249 = vmul.f32 %v1240, %v1209
          %v1250 = vmul.f32 %v1245, %v1210
          %1252 = vset.pattern.permute.xlu0 0
          %1253 = vperm.xlu0 %1252, %v1223
          %v1254 = vpop.permute.xlu0 %1253
          %1257 = vset.pattern.permute.xlu0 0
          %1258 = vperm.xlu0 %1257, %v1224
          %v1259 = vpop.permute.xlu0 %1258
          %1262 = vset.pattern.permute.xlu0 0
          %1263 = vperm.xlu0 %1262, %v1225
          %v1264 = vpop.permute.xlu0 %1263
          %1267 = vset.pattern.permute.xlu0 0
          %1268 = vperm.xlu0 %1267, %v1226
          %v1269 = vpop.permute.xlu0 %1268
          %v1271 = vadd.f32 %v1254, %v1247
          %v1272 = vadd.f32 %v1259, %v1248
          %v1273 = vadd.f32 %v1264, %v1249
          %v1274 = vadd.f32 %v1269, %v1250
          %1275 = vset.pattern.permute.xlu0 1
          %1276 = vperm.xlu0 %1275, %v1219
          %v1277 = vpop.permute.xlu0 %1276
          %1279 = vset.pattern.permute.xlu0 1
          %1280 = vperm.xlu0 %1279, %v1220
          %v1281 = vpop.permute.xlu0 %1280
          %1283 = vset.pattern.permute.xlu0 1
          %1284 = vperm.xlu0 %1283, %v1221
          %v1285 = vpop.permute.xlu0 %1284
          %1287 = vset.pattern.permute.xlu0 1
          %1288 = vperm.xlu0 %1287, %v1222
          %v1289 = vpop.permute.xlu0 %1288
          %v1291 = vmul.f32 %v1277, %v1207
          %v1292 = vmul.f32 %v1277, %v1211
          %v1293 = vmul.f32 %v1281, %v1208
          %v1294 = vmul.f32 %v1281, %v1212
          %v1295 = vmul.f32 %v1285, %v1209
          %v1296 = vmul.f32 %v1285, %v1213
          %v1297 = vmul.f32 %v1289, %v1210
          %v1298 = vmul.f32 %v1289, %v1214
          %1307 = vrot.lane.b32.xlu0 %v1291, 126
          %v1308 = vpop.permute.xlu0 %1307
          %1309 = vrot.lane.b32.xlu0 %v1292, 126
          %v1310 = vpop.permute.xlu0 %1309
          %1311 = vrot.lane.b32.xlu0 %v1293, 126
          %v1312 = vpop.permute.xlu0 %1311
          %1313 = vrot.lane.b32.xlu0 %v1294, 126
          %v1314 = vpop.permute.xlu0 %1313
          %1315 = vrot.lane.b32.xlu0 %v1295, 126
          %v1316 = vpop.permute.xlu0 %1315
          %1317 = vrot.lane.b32.xlu0 %v1296, 126
          %v1318 = vpop.permute.xlu0 %1317
          %1319 = vrot.lane.b32.xlu0 %v1297, 126
          %v1320 = vpop.permute.xlu0 %1319
          %1321 = vrot.lane.b32.xlu0 %v1298, 126
          %v1322 = vpop.permute.xlu0 %1321
          %vm1323 = vcmask 1031168
          %v1324 = vsel %vm1323, %v1308, %v1310
          %v1325 = vsel %vm1323, %v1312, %v1314
          %v1326 = vsel %vm1323, %v1316, %v1318
          %v1327 = vsel %vm1323, %v1320, %v1322
          %v1332 = vadd.f32 %v1271, %v1324
          %v1333 = vadd.f32 %v1272, %v1325
          %v1334 = vadd.f32 %v1273, %v1326
          %v1335 = vadd.f32 %v1274, %v1327
          %1336 = vset.pattern.permute.xlu0 2
          %1337 = vperm.xlu0 %1336, %v1219
          %v1338 = vpop.permute.xlu0 %1337
          %1340 = vset.pattern.permute.xlu0 2
          %1341 = vperm.xlu0 %1340, %v1220
          %v1342 = vpop.permute.xlu0 %1341
          %1344 = vset.pattern.permute.xlu0 2
          %1345 = vperm.xlu0 %1344, %v1221
          %v1346 = vpop.permute.xlu0 %1345
          %1348 = vset.pattern.permute.xlu0 2
          %1349 = vperm.xlu0 %1348, %v1222
          %v1350 = vpop.permute.xlu0 %1349
          %v1352 = vmul.f32 %v1338, %v1207
          %v1353 = vmul.f32 %v1338, %v1211
          %v1354 = vmul.f32 %v1342, %v1208
          %v1355 = vmul.f32 %v1342, %v1212
          %v1356 = vmul.f32 %v1346, %v1209
          %v1357 = vmul.f32 %v1346, %v1213
          %v1358 = vmul.f32 %v1350, %v1210
          %v1359 = vmul.f32 %v1350, %v1214
          %1368 = vrot.lane.b32.xlu0 %v1352, 124
          %v1369 = vpop.permute.xlu0 %1368
          %1370 = vrot.lane.b32.xlu0 %v1353, 124
          %v1371 = vpop.permute.xlu0 %1370
          %1372 = vrot.lane.b32.xlu0 %v1354, 124
          %v1373 = vpop.permute.xlu0 %1372
          %1374 = vrot.lane.b32.xlu0 %v1355, 124
          %v1375 = vpop.permute.xlu0 %1374
          %1376 = vrot.lane.b32.xlu0 %v1356, 124
          %v1377 = vpop.permute.xlu0 %1376
          %1378 = vrot.lane.b32.xlu0 %v1357, 124
          %v1379 = vpop.permute.xlu0 %1378
          %1380 = vrot.lane.b32.xlu0 %v1358, 124
          %v1381 = vpop.permute.xlu0 %1380
          %1382 = vrot.lane.b32.xlu0 %v1359, 124
          %v1383 = vpop.permute.xlu0 %1382
          %vm1384 = vcmask 1014784
          %v1385 = vsel %vm1384, %v1369, %v1371
          %v1386 = vsel %vm1384, %v1373, %v1375
          %v1387 = vsel %vm1384, %v1377, %v1379
          %v1388 = vsel %vm1384, %v1381, %v1383
          %v1393 = vadd.f32 %v1332, %v1385
          %v1394 = vadd.f32 %v1333, %v1386
          %v1395 = vadd.f32 %v1334, %v1387
          %v1396 = vadd.f32 %v1335, %v1388
          %v1397 = vld [vmem:[#allocation5] sm:$0x1]
          %vm1398 = vcmp.gt.f32.partialorder %v1393, 0.0
          %vm1399 = vcmp.gt.f32.partialorder %v1394, 0.0
          %vm1400 = vcmp.gt.f32.partialorder %v1395, 0.0
          %vm1401 = vcmp.gt.f32.partialorder %v1396, 0.0
          %v1403 = vlaneseq
          %v1404 = vshrl.u32 %v1403, 7
          %v1405 = vsub.s32 0, %v1404
          %v1406 = vrot.slane %v1397, %v1405
          %1407 = vset.pattern.permute.xlu0 0
          %1408 = vperm.xlu0 %1407, %v1406
          %v1409 = vpop.permute.xlu0 %1408
          %v1411 = vmul.f32 %v1409, %v1393
          %v1412 = vmul.f32 %v1409, %v1394
          %v1413 = vmul.f32 %v1409, %v1395
          %v1414 = vmul.f32 %v1409, %v1396
          %v1415 = vsel %vm1398, %v1393, %v1411
          %v1416 = vsel %vm1399, %v1394, %v1412
          %v1417 = vsel %vm1400, %v1395, %v1413
          %v1418 = vsel %vm1401, %v1396, %v1414
          %p1419 = scmp.eq.s32.totalorder %s38, 1
          // Predicated region
          $region165: #{tpu_custom_call.1} parent=163 // pred_check
            %p1420 = pneg %p1419
          $region166: #{tpu_custom_call.1} parent=163 // pred_check_branch
            %1422 = sbr.rel (%p1420) target = $region168
          $region167: #{tpu_custom_call.1} parent=163 // pred_region
            %p1423 = scmp.eq.s32.totalorder %s39, 0
            // Predicated region
            $region169: #{tpu_custom_call.1} parent=167 // pred_check
              %p1424 = pneg %p1423
            $region170: #{tpu_custom_call.1} parent=167 // pred_check_branch
              %1426 = sbr.rel (%p1424) target = $region172
            $region171: #{tpu_custom_call.1} parent=167 // pred_region
              %1427 = vst [vmem:[#allocation2 + $0x2] sm:$0x3] 0.0
            $region172: #{tpu_custom_call.1} parent=167 // pred_fallthru
              _
            %v1428 = vld [vmem:[#allocation2 + $0x2] sm:$0x1]
            %v1429 = vadd.f32 %v1415, %v1416
            %v1430 = vadd.f32 %v1429, %v1417
            %v1431 = vadd.f32 %v1430, %v1418
            %v1432 = vrot.slane %v1431, 4
            %v1433 = vadd.f32 %v1431, %v1432
            %v1434 = vrot.slane %v1433, 2
            %v1435 = vadd.f32 %v1433, %v1434
            %v1436 = vrot.slane %v1435, 1
            %v1437 = vadd.f32 %v1435, %v1436
            %v1438 = vadd.f32 %v1428, %v1437
            %1439 = vst [vmem:[#allocation2 + $0x2] sm:$0x1] %v1438
            %v1440 = vld [vmem:[#allocation2 + $0x3] sm:$0x1]
            %v1441 = vmul.f32 %v1415, %v1415
            %v1442 = vmul.f32 %v1416, %v1416
            %v1443 = vmul.f32 %v1417, %v1417
            %v1444 = vmul.f32 %v1418, %v1418
            %v1445 = vadd.f32 %v1441, %v1442
            %v1446 = vadd.f32 %v1445, %v1443
            %v1447 = vadd.f32 %v1446, %v1444
            %v1448 = vrot.slane %v1447, 4
            %v1449 = vadd.f32 %v1447, %v1448
            %v1450 = vrot.slane %v1449, 2
            %v1451 = vadd.f32 %v1449, %v1450
            %v1452 = vrot.slane %v1451, 1
            %v1453 = vadd.f32 %v1451, %v1452
            %v1454 = vadd.f32 %v1440, %v1453
            %1455 = vst [vmem:[#allocation2 + $0x3] sm:$0x1] %v1454
          $region168: #{tpu_custom_call.1} parent=163 // pred_fallthru
            _
          %p1456 = scmp.eq.s32.totalorder %s38, 2
          // Predicated region
          $region173: #{tpu_custom_call.1} parent=163 // pred_check
            %p1457 = pneg %p1456
          $region174: #{tpu_custom_call.1} parent=163 // pred_check_branch
            %1459 = sbr.rel (%p1457) target = $region176
          $region175: #{tpu_custom_call.1} parent=163 // pred_region
            %v1460 = vld [vmem:[#allocation2 + $0x2] sm:$0x1]
            %v1461 = vsel %vm818, %v1460, 0.0
            %1462 = vadd.xlane.f32.xlu0 %v1461
            %v1463 = vpop.xlane.xlu0 %1462
            %v1464 = vld [vmem:[#allocation2 + $0x3] sm:$0x1]
            %v1465 = vsel %vm818, %v1464, 0.0
            %1466 = vadd.xlane.f32.xlu0 %v1465
            %v1467 = vpop.xlane.xlu0 %1466
            %v1468 = vmul.f32 %v1463, 6.1035156e-05
            %v1469 = vmul.f32 %v1467, 6.1035156e-05
            %v1470 = vmul.f32 %v1468, %v1468
            %v1471 = vsub.f32 %v1469, %v1470
            %v1472 = vld [vmem:[%s10] sm:$0xff]
            %v1473 = vld [vmem:[%s10 + $0x8] sm:$0xff]
            %v1474 = vld [vmem:[%s10 + $0x10] sm:$0xff]
            %v1475 = vld [vmem:[%s10 + $0x18] sm:$0xff]
            %v1476 = vadd.f32 %v1471, 1e-05
            %v1477 = vrsqrt.pop %v1476
            %v1478 = vlaneseq
            %v1479 = vshrl.u32 %v1478, 7
            %v1480 = vsub.s32 0, %v1479
            %v1481 = vrot.slane %v1477, %v1480
            %v1482 = vmul.f32 %v1472, %v1481
            %v1483 = vmul.f32 %v1473, %v1481
            %v1484 = vmul.f32 %v1474, %v1481
            %v1485 = vmul.f32 %v1475, %v1481
            %v1486 = vld [vmem:[%s11] sm:$0xff]
            %v1487 = vld [vmem:[%s11 + $0x8] sm:$0xff]
            %v1488 = vld [vmem:[%s11 + $0x10] sm:$0xff]
            %v1489 = vld [vmem:[%s11 + $0x18] sm:$0xff]
            %v1490 = vlaneseq
            %v1491 = vshrl.u32 %v1490, 7
            %v1492 = vsub.s32 0, %v1491
            %v1493 = vrot.slane %v1468, %v1492
            %v1494 = vmul.f32 %v1493, %v1482
            %v1495 = vmul.f32 %v1493, %v1483
            %v1496 = vmul.f32 %v1493, %v1484
            %v1497 = vmul.f32 %v1493, %v1485
            %v1498 = vsub.f32 %v1486, %v1494
            %v1499 = vsub.f32 %v1487, %v1495
            %v1500 = vsub.f32 %v1488, %v1496
            %v1501 = vsub.f32 %v1489, %v1497
            %1503 = vset.pattern.permute.xlu0 0
            %1504 = vperm.xlu0 %1503, %v1482
            %v1505 = vpop.permute.xlu0 %1504
            %1508 = vset.pattern.permute.xlu0 0
            %1509 = vperm.xlu0 %1508, %v1483
            %v1510 = vpop.permute.xlu0 %1509
            %1513 = vset.pattern.permute.xlu0 0
            %1514 = vperm.xlu0 %1513, %v1484
            %v1515 = vpop.permute.xlu0 %1514
            %1518 = vset.pattern.permute.xlu0 0
            %1519 = vperm.xlu0 %1518, %v1485
            %v1520 = vpop.permute.xlu0 %1519
            %v1522 = vmul.f32 %v1505, %v1415
            %v1523 = vmul.f32 %v1510, %v1416
            %v1524 = vmul.f32 %v1515, %v1417
            %v1525 = vmul.f32 %v1520, %v1418
            %1527 = vset.pattern.permute.xlu0 0
            %1528 = vperm.xlu0 %1527, %v1498
            %v1529 = vpop.permute.xlu0 %1528
            %1532 = vset.pattern.permute.xlu0 0
            %1533 = vperm.xlu0 %1532, %v1499
            %v1534 = vpop.permute.xlu0 %1533
            %1537 = vset.pattern.permute.xlu0 0
            %1538 = vperm.xlu0 %1537, %v1500
            %v1539 = vpop.permute.xlu0 %1538
            %1542 = vset.pattern.permute.xlu0 0
            %1543 = vperm.xlu0 %1542, %v1501
            %v1544 = vpop.permute.xlu0 %1543
            %v1546 = vadd.f32 %v1522, %v1529
            %v1547 = vadd.f32 %v1523, %v1534
            %v1548 = vadd.f32 %v1524, %v1539
            %v1549 = vadd.f32 %v1525, %v1544
            %v1550 = vld [vmem:[%s12] sm:$0xff]
            %v1551 = vld [vmem:[%s12 + $0x8] sm:$0xff]
            %v1552 = vld [vmem:[%s13] sm:$0xff]
            %v1553 = vld [vmem:[%s13 + $0x8] sm:$0xff]
            %1555 = vset.pattern.permute.xlu0 0
            %1556 = vperm.xlu0 %1555, %v1552
            %v1557 = vpop.permute.xlu0 %1556
            %1560 = vset.pattern.permute.xlu0 0
            %1561 = vperm.xlu0 %1560, %v1553
            %v1562 = vpop.permute.xlu0 %1561
            %vm1564 = vcmask 261120
            %v1566 = vsel %vm1564, %v1550, 0
            %v1569 = vsel %vm1564, %v1551, 0
            %1571 = vmatprep.subr.mxu0 0.0
            %1572 = vmatpush1.msra.mxu0 %v1546
            %1573 = vmatprep.subr.mxu0 0.0
            %1574 = vmatpush1.msra.mxu0 %v1547
            %1575 = vmatprep.subr.mxu0 0.0
            %1576 = vmatpush1.msra.mxu0 %v1548
            %1577 = vmatprep.subr.mxu0 0.0
            %1578 = vmatpush1.msra.mxu0 %v1549
            %1579 = vmatprep.subr.mxu0 0.0
            %1580 = vmatpush1.msra.mxu0 0.0
            %1581 = vmatprep.subr.mxu0 0.0
            %1582 = vmatpush1.msra.mxu0 0.0
            %1583 = vmatprep.subr.mxu0 0.0
            %1584 = vmatpush1.msra.mxu0 0.0
            %1585 = vmatprep.subr.mxu0 0.0
            %1586 = vmatpush1.msra.mxu0 0.0
            %1587 = vmatprep.subr.mxu0 0.0
            %1588 = vmatpush1.msra.mxu0 0.0
            %1589 = vmatprep.subr.mxu0 0.0
            %1590 = vmatpush1.msra.mxu0 0.0
            %1591 = vmatprep.subr.mxu0 0.0
            %1592 = vmatpush1.msra.mxu0 0.0
            %1593 = vmatprep.subr.mxu0 0.0
            %1594 = vmatpush1.msra.mxu0 0.0
            %1595 = vmatprep.subr.mxu0 0.0
            %1596 = vmatpush1.msra.mxu0 0.0
            %1597 = vmatprep.subr.mxu0 0.0
            %1598 = vmatpush1.msra.mxu0 0.0
            %1599 = vmatprep.subr.mxu0 0.0
            %1600 = vmatpush1.msra.mxu0 0.0
            %1601 = vmatprep.subr.mxu0 0.0
            %1602 = vmatpush1.msra.mxu0 0.0
            %1603 = vmatprep.subr.mxu0 0.0
            %1604 = vmatpush1.msra.mxu0 0.0
            %1605 = vmatprep.subr.mxu0 0.0
            %1606 = vmatpush1.msra.mxu0 0.0
            %1607 = vmatprep.subr.mxu0 0.0
            %1608 = vmatpush1.msra.mxu0 0.0
            %1609 = vmatprep.subr.mxu0 0.0
            %1610 = vmatpush1.msra.mxu0 0.0
            %1611 = vmatprep.subr.mxu0 0.0
            %1612 = vmatpush1.msra.mxu0 0.0
            %1613 = vmatprep.subr.mxu0 0.0
            %1614 = vmatpush1.msra.mxu0 0.0
            %1615 = vmatprep.subr.mxu0 0.0
            %1616 = vmatpush1.msra.mxu0 0.0
            %1617 = vmatprep.subr.mxu0 0.0
            %1618 = vmatpush1.msra.mxu0 0.0
            %1619 = vmatprep.subr.mxu0 0.0
            %1620 = vmatpush1.msra.mxu0 0.0
            %1621 = vmatprep.subr.mxu0 0.0
            %1622 = vmatpush1.msra.mxu0 0.0
            %1623 = vmatprep.subr.mxu0 0.0
            %1624 = vmatpush1.msra.mxu0 0.0
            %1625 = vmatprep.subr.mxu0 0.0
            %1626 = vmatpush1.msra.mxu0 0.0
            %1627 = vmatprep.subr.mxu0 0.0
            %1628 = vmatpush1.msra.mxu0 0.0
            %1629 = vmatprep.subr.mxu0 0.0
            %1630 = vmatpush1.msra.mxu0 0.0
            %1631 = vmatprep.subr.mxu0 0.0
            %1632 = vmatpush1.msra.mxu0 0.0
            %1633 = vmatprep.subr.mxu0 0.0
            %1634 = vmatpush1.msra.mxu0 0.0
            %1635 = vmatprep.mubr.f32.mxu0 0.0
            %1636 = vmatmul.mubr.f32.gmra.mrb[0].mxu0 %v1566
            %v1637 = vpop.f32.mrb[0].mxu0
            %v1638 = vadd.f32 %v1557, %v1637
            %v1639 = vpop.f32.mrb[0].mxu0
            %1640 = vmatprep.mubr.f32.mxu0 0.0
            %1641 = vmatmul.mubr.f32.gmra.mrb[0].mxu0 %v1569
            %v1642 = vpop.f32.mrb[0].mxu0
            %v1643 = vadd.f32 %v1562, %v1642
            %v1644 = vpop.f32.mrb[0].mxu0
            %1645 = vdwg.mxu0
            %v1646 = vadd.f32 %v1638, %v621
            %v1647 = vadd.f32 %v1643, %v622
            %1648 = vst [vmem:[%s613] sm:$0xff] %v1646
            %1649 = vst [vmem:[%s613 + $0x8] sm:$0xff] %v1647
          $region176: #{tpu_custom_call.1} parent=163 // pred_fallthru
            _
        $region164: #{tpu_custom_call.1} parent=143 // pred_fallthru
          _
        %s1650 = sand.u32 %s383, 1
        %s1651 = scalar_lea.sflag [#allocation9], %s1650
        %s1652 = sand.u32 %s383, 1
        %s1653 = smul.addr %s1652, 16
        %s1654 = scalar_lea.vmem [#allocation8], %s1653
        // Predicated region
        $region177: #{tpu_custom_call.1} parent=143 // pred_check
          %p1655 = pneg %p393
        $region178: #{tpu_custom_call.1} parent=143 // pred_check_branch
          %1657 = sbr.rel (%p1655) target = $region180
        $region179: #{tpu_custom_call.1} parent=143 // pred_region
          %p1658 = scmp.eq.s32.totalorder %s38, 2
          %s1659 = scalar_select %p1658, %s39, 0
          %s1661 = ssub.s32 256, 256
          %1662 = vsyncadd %s1651, %s1661
          %s1663 = smul.addr %s37, 8
          %s1664 = sadd.s32 %s1659, %s1663
          %s1665 = smul.addr %s1664, 128
          %s1666 = scalar_lea.hbm %s14, %s1665
          %s1667 = sshll.u32 %s1654, 4
          %s1668 = int_to_ptr.vmem [resolvable:$true] %s1667
          %1673 = dma.vmem_to_hbm [thread:$0]  %s1668, 256, %s1666, %s1651, 128, 512, 8
        $region180: #{tpu_custom_call.1} parent=143 // pred_fallthru
          _
      $region144: #{tpu_custom_call.1} parent=5 // pred_fallthru
        _
      %p1674 = scmp.le.s32.totalorder 2, %s27
      // Predicated region
      $region181: #{tpu_custom_call.1} parent=5 // pred_check
        %p1675 = pneg %p1674
      $region182: #{tpu_custom_call.1} parent=5 // pred_check_branch
        %1677 = sbr.rel (%p1675) target = $region184
      $region183: #{tpu_custom_call.1} parent=5 // pred_region
        %s1678 = ssub.s32 %s27, 2
        // Predicated region
        $region185: #{tpu_custom_call.1} parent=183 // pred_check
          %p1679 = pneg %p399
        $region186: #{tpu_custom_call.1} parent=183 // pred_check_branch
          %1681 = sbr.rel (%p1679) target = $region188
        $region187: #{tpu_custom_call.1} parent=183 // pred_region
          %s1682 = sand.u32 %s384, 1
          %s1683 = scalar_lea.sflag [#allocation9], %s1682
          %s1684 = sand.u32 %s384, 1
          %s1685 = smul.addr %s1684, 16
          %s1686 = scalar_lea.vmem [#allocation8], %s1685
          %1687 = dma.done %s1683, 256
        $region188: #{tpu_custom_call.1} parent=183 // pred_fallthru
          _
      $region184: #{tpu_custom_call.1} parent=5 // pred_fallthru
        _
    $region6: #{tpu_custom_call.1} parent=1 // loop_footer
      %s31 = sadd.s32 1, %s27
    $region7: #{tpu_custom_call.1} parent=1 // loop_footer_branch
      %26 = sbr.rel target = $region3
    $region8: #{tpu_custom_call.1} parent=1 // loop_exit
      _
    %1688 = vsyncpa [#allocation9], 1
    %s1689 = scalar_lea.sflag [#allocation9], 1
    %1690 = vsyncpa %s1689, 1

</llo_original>
